<compile_context>
chip_gen: v7x
topology: tpu7x:2x2x1
jax: 0.10.0
libtpu: 0.0.40
codegen_flags: <defaults>
</compile_context>

<pallas_src>
import functools

import jax
import jax.numpy as jnp
import numpy as np
from jax import lax
from jax.experimental import pallas as pl
from jax.experimental.pallas import tpu as pltpu


def _layer4_kernel(xp_ref, w_ref, gamma_ref, beta_ref, o_ref, acc_ref,
                   *, N, H, W, Cpad, K, eps):
    """One (cout_block, kh) grid step of fused conv(5x5) + ReLU + training-mode BatchNorm.

    xp_ref    : (N, H+K-1, W+K-1, Cpad)  spatially + channel zero-padded input (resident)
    w_ref     : (1, K*Cpad, CB)          weights for filter row kh, this Cout block
    gamma_ref : (1, CB)                  BN weight slice
    beta_ref  : (1, CB)                  BN bias slice
    o_ref     : (M, CB)                  output slab for this Cout block (M = N*H*W)
    acc_ref   : VMEM (M, CB) f32         conv accumulator, persists across kh steps
    """
    kh = pl.program_id(1)          # reduction axis over the 5 filter rows
    M = N * H * W

    @pl.when(kh == 0)
    def _init():
        acc_ref[...] = jnp.zeros_like(acc_ref)

    # --- per-tap accumulation: 5 static kw taps of this filter row feed the MXU directly ---
    acc = acc_ref[...]
    for kw in range(K):
        # dynamic start only on the non-tiled H dim; kw slice on the sublane dim stays static
        patch = xp_ref[:, pl.ds(kh, H), kw:kw + W, :].reshape(M, Cpad)
        w_tap = w_ref[0, kw * Cpad:(kw + 1) * Cpad, :]
        acc = acc + jnp.dot(patch, w_tap, preferred_element_type=jnp.float32)
    acc_ref[...] = acc

    # --- last filter row: ReLU + BN (batch statistics of this Cout block) + affine + store ---
    @pl.when(kh == K - 1)
    def _finalize():
        acc_ref[...] = jnp.maximum(acc_ref[...], 0.0)        # stage ReLU'd activation in VMEM
        inv_m = 1.0 / M
        mean = jnp.sum(acc_ref[...], axis=0, keepdims=True) * inv_m          # (1, CB)
        centered = acc_ref[...] - mean
        var = jnp.sum(centered * centered, axis=0, keepdims=True) * inv_m    # biased, like PyTorch
        scale = gamma_ref[...] * lax.rsqrt(var + eps)
        o_ref[...] = centered * scale + beta_ref[...]         # single lane-dense write


def _layer4_forward_impl(x_nchw, conv_w, gamma, beta, eps=1e-5):
    """x_nchw: (N, 96, H, W) f32; conv_w: (256, 96, 5, 5) f32 (PyTorch OIHW)."""
    N, Cin, H, W = x_nchw.shape
    Cout, Cin_w, K, _ = conv_w.shape
    assert Cin_w == Cin
    pad = K // 2
    Cpad = ((Cin + 127) // 128) * 128          # 96 -> 128: lane/MXU-aligned reduction dim
    M = N * H * W
    COUT_BLK = 128
    assert M % 8 == 0, "N*H*W must be sublane (8) aligned for the (M, 128) output blocks"
    assert Cout % COUT_BLK == 0

    # ---- glue: NCHW -> NHWC, zero-pad spatial borders and channels (input is tiny) ----
    # TODO(synk): in a real pipeline, accept NHWC input / pre-transformed weights upstream so
    # this per-call glue (and the weight rewrite below) is not re-executed on every forward.
    x = jnp.transpose(x_nchw, (0, 2, 3, 1)).astype(jnp.float32)
    xp = jnp.pad(x, ((0, 0), (pad, pad), (pad, pad), (0, Cpad - Cin)))

    # ---- glue: weights OIHW -> (K, K, Cin, Cout) -> channel-pad -> (K, K*Cpad, Cout) ----
    w = jnp.transpose(conv_w, (2, 3, 1, 0)).astype(jnp.float32)
    w = jnp.pad(w, ((0, 0), (0, 0), (0, Cpad - Cin), (0, 0)))
    w = w.reshape(K, K * Cpad, Cout)

    gamma2 = gamma.reshape(1, Cout).astype(jnp.float32)
    beta2 = beta.reshape(1, Cout).astype(jnp.float32)

    kernel = functools.partial(_layer4_kernel,
                               N=N, H=H, W=W, Cpad=Cpad, K=K, eps=eps)

    o_flat = pl.pallas_call(
        kernel,
        out_shape=jax.ShapeDtypeStruct((M, Cout), jnp.float32),
        grid_spec=pltpu.PrefetchScalarGridSpec(
            num_scalar_prefetch=0,
            # (Cout blocks, filter rows): Cout axis is embarrassingly parallel (per-channel BN),
            # kh axis is the conv reduction -> accumulator pattern with pl.when init/finalize.
            grid=(Cout // COUT_BLK, K),
            in_specs=[
                # whole padded input stays resident in VMEM (constant block index, ~150 KiB)
                pl.BlockSpec((N, H + 2 * pad, W + 2 * pad, Cpad),
                             lambda c, k: (0, 0, 0, 0)),
                # per-(cout block, kh) weight chunk: 320 KiB, double-buffered -> DMA overlaps compute
                pl.BlockSpec((1, K * Cpad, COUT_BLK), lambda c, k: (k, 0, c)),
                pl.BlockSpec((1, COUT_BLK), lambda c, k: (0, c)),
                pl.BlockSpec((1, COUT_BLK), lambda c, k: (0, c)),
            ],
            out_specs=pl.BlockSpec((M, COUT_BLK), lambda c, k: (0, c)),
            scratch_shapes=[pltpu.VMEM((M, COUT_BLK), jnp.float32)],   # conv accumulator
        ),
        compiler_params=pltpu.CompilerParams(
            dimension_semantics=("parallel", "arbitrary"),
            vmem_limit_bytes=32 * 1024 * 1024),
    )(xp, w, gamma2, beta2)

    # ---- glue: back to NCHW ----
    return jnp.transpose(o_flat.reshape(N, H, W, Cout), (0, 3, 1, 2))


layer4_forward = jax.jit(_layer4_forward_impl, static_argnames=("eps",))


def layer4_reference(x_nchw, conv_w, gamma, beta, eps=1e-5):
    """Pure-JAX reference (conv -> relu -> training-mode batchnorm)."""
    y = lax.conv_general_dilated(
        x_nchw, conv_w, window_strides=(1, 1), padding=((2, 2), (2, 2)),
        dimension_numbers=("NCHW", "OIHW", "NCHW"),
        precision=lax.Precision.HIGHEST)
    y = jnp.maximum(y, 0.0)
    mean = jnp.mean(y, axis=(0, 2, 3), keepdims=True)
    var = jnp.mean((y - mean) ** 2, axis=(0, 2, 3), keepdims=True)
    g = gamma.reshape(1, -1, 1, 1)
    b = beta.reshape(1, -1, 1, 1)
    return g * (y - mean) * lax.rsqrt(var + eps) + b


if __name__ == "__main__":
    key = jax.random.PRNGKey(0)
    k_x, k_w = jax.random.split(key)

    N, Cin, H, W = 2, 96, 8, 8     # Cin/Cout fixed by the module; small batch/spatial
    Cout, K = 256, 5

    x = jax.random.normal(k_x, (N, Cin, H, W), dtype=jnp.float32)
    # Deterministic synthetic conv weights (kaiming-like std); BN params at PyTorch defaults.
    conv_w = jax.random.normal(k_w, (Cout, Cin, K, K), dtype=jnp.float32) * (2.0 / (Cin * K * K)) ** 0.5
    gamma = jnp.ones((Cout,), dtype=jnp.float32)
    beta = jnp.zeros((Cout,), dtype=jnp.float32)

    out = layer4_forward(x, conv_w, gamma, beta)
    out = jax.block_until_ready(out)

    ref = jax.block_until_ready(layer4_reference(x, conv_w, gamma, beta))
    np.testing.assert_allclose(np.asarray(out), np.asarray(ref), rtol=2e-3, atol=2e-3)
    assert out.shape == (N, Cout, H, W) and out.dtype == jnp.float32

    # TODO(synk): PyTorch training-mode BN also updates running_mean/running_var buffers as a
    # side effect; that buffer update does not affect the forward output and is not modeled.

    print("KERNEL_OK")
</pallas_src>

<mosaic_0001>
module attributes {stable_mosaic.version = 11 : i64} {
  func.func @_layer4_kernel(%arg0: i32, %arg1: i32, %arg2: memref<2x12x12x128xf32, #tpu.memory_space<vmem>>, %arg3: memref<1x640x128xf32, #tpu.memory_space<vmem>>, %arg4: memref<1x128xf32, #tpu.memory_space<vmem>>, %arg5: memref<1x128xf32, #tpu.memory_space<vmem>>, %arg6: memref<128x128xf32, #tpu.memory_space<vmem>>, %arg7: memref<128x128xf32, #tpu.memory_space<vmem>>) attributes {dimension_semantics = [#tpu.dimension_semantics<parallel>, #tpu.dimension_semantics<arbitrary>], iteration_bounds = array<i64: 2, 5>, scalar_prefetch = 0 : i64, scratch_operands = 1 : i64, tpu.core_type = #tpu.core_type<tc>, window_params = [{pipeline_mode = #tpu.pipeline_mode<synchronous>, transform_indices = @transform_0, window_bounds = array<i64: 2, 12, 12, 128>}, {transform_indices = @transform_1, window_bounds = array<i64: 1, 640, 128>}, {transform_indices = @transform_2, window_bounds = array<i64: 1, 128>}, {transform_indices = @transform_3, window_bounds = array<i64: 1, 128>}, {transform_indices = @transform_4, window_bounds = array<i64: 128, 128>}]} {
    %c0_i32 = arith.constant 0 : i32
    %0 = arith.cmpi eq, %arg1, %c0_i32 : i32
    %1 = arith.extui %0 : i1 to i32
    %c0_i32_0 = arith.constant 0 : i32
    %2 = arith.cmpi ne, %1, %c0_i32_0 : i32
    scf.if %2 {
      %cst_31 = arith.constant 0.000000e+00 : f32
      %43 = vector.broadcast %cst_31 : f32 to vector<128x128xf32>
      %c0_32 = arith.constant 0 : index
      %c0_33 = arith.constant 0 : index
      %44 = vector.load %arg7[%c0_32, %c0_33] : memref<128x128xf32, #tpu.memory_space<vmem>>, vector<128x128xf32>
      tpu.vector_store %arg7[%c0_32, %c0_33], %43 {strides = array<i32>} : memref<128x128xf32, #tpu.memory_space<vmem>>, vector<128x128xf32>,
    } else {
    }
    %c0 = arith.constant 0 : index
    %c0_1 = arith.constant 0 : index
    %3 = vector.load %arg7[%c0, %c0_1] : memref<128x128xf32, #tpu.memory_space<vmem>>, vector<128x128xf32>
    %c0_2 = arith.constant 0 : index
    %4 = arith.index_cast %arg1 : i32 to index
    %c0_3 = arith.constant 0 : index
    %c0_4 = arith.constant 0 : index
    %5 = vector.load %arg2[%c0_2, %4, %c0_3, %c0_4] : memref<2x12x12x128xf32, #tpu.memory_space<vmem>>, vector<2x8x8x128xf32>
    %6 = vector.shape_cast %5 : vector<2x8x8x128xf32> to vector<128x128xf32>
    %c0_5 = arith.constant 0 : index
    %c0_6 = arith.constant 0 : index
    %c0_7 = arith.constant 0 : index
    %7 = vector.load %arg3[%c0_5, %c0_6, %c0_7] : memref<1x640x128xf32, #tpu.memory_space<vmem>>, vector<1x128x128xf32>
    %8 = vector.shape_cast %7 : vector<1x128x128xf32> to vector<128x128xf32>
    %cst = arith.constant dense<0.000000e+00> : vector<128x128xf32>
    %9 = tpu.matmul %6, %8, %cst {dimension_numbers = #tpu.dot_dimension_numbers<[1], [0], [0], [1], [0, 0, 1, 1], [], []>} : vector<128x128xf32>, vector<128x128xf32>, vector<128x128xf32> -> vector<128x128xf32>
    %10 = arith.addf %3, %9 : vector<128x128xf32>
    %c0_8 = arith.constant 0 : index
    %11 = arith.index_cast %arg1 : i32 to index
    %c1 = arith.constant 1 : index
    %c0_9 = arith.constant 0 : index
    %12 = vector.load %arg2[%c0_8, %11, %c1, %c0_9] : memref<2x12x12x128xf32, #tpu.memory_space<vmem>>, vector<2x8x8x128xf32>
    %13 = vector.shape_cast %12 : vector<2x8x8x128xf32> to vector<128x128xf32>
    %c0_10 = arith.constant 0 : index
    %c128 = arith.constant 128 : index
    %c0_11 = arith.constant 0 : index
    %14 = vector.load %arg3[%c0_10, %c128, %c0_11] : memref<1x640x128xf32, #tpu.memory_space<vmem>>, vector<1x128x128xf32>
    %15 = vector.shape_cast %14 : vector<1x128x128xf32> to vector<128x128xf32>
    %cst_12 = arith.constant dense<0.000000e+00> : vector<128x128xf32>
    %16 = tpu.matmul %13, %15, %cst_12 {dimension_numbers = #tpu.dot_dimension_numbers<[1], [0], [0], [1], [0, 0, 1, 1], [], []>} : vector<128x128xf32>, vector<128x128xf32>, vector<128x128xf32> -> vector<128x128xf32>
    %17 = arith.addf %10, %16 : vector<128x128xf32>
    %c0_13 = arith.constant 0 : index
    %18 = arith.index_cast %arg1 : i32 to index
    %c2 = arith.constant 2 : index
    %c0_14 = arith.constant 0 : index
    %19 = vector.load %arg2[%c0_13, %18, %c2, %c0_14] : memref<2x12x12x128xf32, #tpu.memory_space<vmem>>, vector<2x8x8x128xf32>
    %20 = vector.shape_cast %19 : vector<2x8x8x128xf32> to vector<128x128xf32>
    %c0_15 = arith.constant 0 : index
    %c256 = arith.constant 256 : index
    %c0_16 = arith.constant 0 : index
    %21 = vector.load %arg3[%c0_15, %c256, %c0_16] : memref<1x640x128xf32, #tpu.memory_space<vmem>>, vector<1x128x128xf32>
    %22 = vector.shape_cast %21 : vector<1x128x128xf32> to vector<128x128xf32>
    %cst_17 = arith.constant dense<0.000000e+00> : vector<128x128xf32>
    %23 = tpu.matmul %20, %22, %cst_17 {dimension_numbers = #tpu.dot_dimension_numbers<[1], [0], [0], [1], [0, 0, 1, 1], [], []>} : vector<128x128xf32>, vector<128x128xf32>, vector<128x128xf32> -> vector<128x128xf32>
    %24 = arith.addf %17, %23 : vector<128x128xf32>
    %c0_18 = arith.constant 0 : index
    %25 = arith.index_cast %arg1 : i32 to index
    %c3 = arith.constant 3 : index
    %c0_19 = arith.constant 0 : index
    %26 = vector.load %arg2[%c0_18, %25, %c3, %c0_19] : memref<2x12x12x128xf32, #tpu.memory_space<vmem>>, vector<2x8x8x128xf32>
    %27 = vector.shape_cast %26 : vector<2x8x8x128xf32> to vector<128x128xf32>
    %c0_20 = arith.constant 0 : index
    %c384 = arith.constant 384 : index
    %c0_21 = arith.constant 0 : index
    %28 = vector.load %arg3[%c0_20, %c384, %c0_21] : memref<1x640x128xf32, #tpu.memory_space<vmem>>, vector<1x128x128xf32>
    %29 = vector.shape_cast %28 : vector<1x128x128xf32> to vector<128x128xf32>
    %cst_22 = arith.constant dense<0.000000e+00> : vector<128x128xf32>
    %30 = tpu.matmul %27, %29, %cst_22 {dimension_numbers = #tpu.dot_dimension_numbers<[1], [0], [0], [1], [0, 0, 1, 1], [], []>} : vector<128x128xf32>, vector<128x128xf32>, vector<128x128xf32> -> vector<128x128xf32>
    %31 = arith.addf %24, %30 : vector<128x128xf32>
    %c0_23 = arith.constant 0 : index
    %32 = arith.index_cast %arg1 : i32 to index
    %c4 = arith.constant 4 : index
    %c0_24 = arith.constant 0 : index
    %33 = vector.load %arg2[%c0_23, %32, %c4, %c0_24] : memref<2x12x12x128xf32, #tpu.memory_space<vmem>>, vector<2x8x8x128xf32>
    %34 = vector.shape_cast %33 : vector<2x8x8x128xf32> to vector<128x128xf32>
    %c0_25 = arith.constant 0 : index
    %c512 = arith.constant 512 : index
    %c0_26 = arith.constant 0 : index
    %35 = vector.load %arg3[%c0_25, %c512, %c0_26] : memref<1x640x128xf32, #tpu.memory_space<vmem>>, vector<1x128x128xf32>
    %36 = vector.shape_cast %35 : vector<1x128x128xf32> to vector<128x128xf32>
    %cst_27 = arith.constant dense<0.000000e+00> : vector<128x128xf32>
    %37 = tpu.matmul %34, %36, %cst_27 {dimension_numbers = #tpu.dot_dimension_numbers<[1], [0], [0], [1], [0, 0, 1, 1], [], []>} : vector<128x128xf32>, vector<128x128xf32>, vector<128x128xf32> -> vector<128x128xf32>
    %38 = arith.addf %31, %37 : vector<128x128xf32>
    %c0_28 = arith.constant 0 : index
    %c0_29 = arith.constant 0 : index
    %39 = vector.load %arg7[%c0_28, %c0_29] : memref<128x128xf32, #tpu.memory_space<vmem>>, vector<128x128xf32>
    tpu.vector_store %arg7[%c0_28, %c0_29], %38 {strides = array<i32>} : memref<128x128xf32, #tpu.memory_space<vmem>>, vector<128x128xf32>,
    %c4_i32 = arith.constant 4 : i32
    %40 = arith.cmpi eq, %arg1, %c4_i32 : i32
    %41 = arith.extui %40 : i1 to i32
    %c0_i32_30 = arith.constant 0 : i32
    %42 = arith.cmpi ne, %41, %c0_i32_30 : i32
    scf.if %42 {
      %c0_31 = arith.constant 0 : index
      %c0_32 = arith.constant 0 : index
      %43 = vector.load %arg7[%c0_31, %c0_32] : memref<128x128xf32, #tpu.memory_space<vmem>>, vector<128x128xf32>
      %cst_33 = arith.constant 0.000000e+00 : f32
      %44 = vector.broadcast %cst_33 : f32 to vector<128x128xf32>
      %45 = arith.maximumf %43, %44 : vector<128x128xf32>
      %c0_34 = arith.constant 0 : index
      %c0_35 = arith.constant 0 : index
      %46 = vector.load %arg7[%c0_34, %c0_35] : memref<128x128xf32, #tpu.memory_space<vmem>>, vector<128x128xf32>
      tpu.vector_store %arg7[%c0_34, %c0_35], %45 {strides = array<i32>} : memref<128x128xf32, #tpu.memory_space<vmem>>, vector<128x128xf32>,
      %c0_36 = arith.constant 0 : index
      %c0_37 = arith.constant 0 : index
      %47 = vector.load %arg7[%c0_36, %c0_37] : memref<128x128xf32, #tpu.memory_space<vmem>>, vector<128x128xf32>
      %cst_38 = arith.constant dense<0.000000e+00> : vector<128xf32>
      %48 = vector.multi_reduction <add>, %47, %cst_38 [0] : vector<128x128xf32> to vector<128xf32>
      %49 = vector.shape_cast %48 : vector<128xf32> to vector<1x128xf32>
      %cst_39 = arith.constant 7.812500e-03 : f32
      %50 = vector.broadcast %cst_39 : f32 to vector<1x128xf32>
      %51 = arith.mulf %49, %50 : vector<1x128xf32>
      %c0_40 = arith.constant 0 : index
      %c0_41 = arith.constant 0 : index
      %52 = vector.load %arg7[%c0_40, %c0_41] : memref<128x128xf32, #tpu.memory_space<vmem>>, vector<128x128xf32>
      %53 = vector.broadcast %51 : vector<1x128xf32> to vector<128x128xf32>
      %54 = arith.subf %52, %53 : vector<128x128xf32>
      %55 = arith.mulf %54, %54 : vector<128x128xf32>
      %cst_42 = arith.constant dense<0.000000e+00> : vector<128xf32>
      %56 = vector.multi_reduction <add>, %55, %cst_42 [0] : vector<128x128xf32> to vector<128xf32>
      %57 = vector.shape_cast %56 : vector<128xf32> to vector<1x128xf32>
      %cst_43 = arith.constant 7.812500e-03 : f32
      %58 = vector.broadcast %cst_43 : f32 to vector<1x128xf32>
      %59 = arith.mulf %57, %58 : vector<1x128xf32>
      %c0_44 = arith.constant 0 : index
      %c0_45 = arith.constant 0 : index
      %60 = vector.load %arg4[%c0_44, %c0_45] : memref<1x128xf32, #tpu.memory_space<vmem>>, vector<1x128xf32>
      %cst_46 = arith.constant 9.99999974E-6 : f32
      %61 = vector.broadcast %cst_46 : f32 to vector<1x128xf32>
      %62 = arith.addf %59, %61 : vector<1x128xf32>
      %63 = math.rsqrt %62 : vector<1x128xf32>
      %64 = arith.mulf %60, %63 : vector<1x128xf32>
      %65 = vector.broadcast %64 : vector<1x128xf32> to vector<128x128xf32>
      %66 = arith.mulf %54, %65 : vector<128x128xf32>
      %c0_47 = arith.constant 0 : index
      %c0_48 = arith.constant 0 : index
      %67 = vector.load %arg5[%c0_47, %c0_48] : memref<1x128xf32, #tpu.memory_space<vmem>>, vector<1x128xf32>
      %68 = vector.broadcast %67 : vector<1x128xf32> to vector<128x128xf32>
      %69 = arith.addf %66, %68 : vector<128x128xf32>
      %c0_49 = arith.constant 0 : index
      %c0_50 = arith.constant 0 : index
      %70 = vector.load %arg6[%c0_49, %c0_50] : memref<128x128xf32, #tpu.memory_space<vmem>>, vector<128x128xf32>
      tpu.vector_store %arg6[%c0_49, %c0_50], %69 {strides = array<i32>} : memref<128x128xf32, #tpu.memory_space<vmem>>, vector<128x128xf32>,
    } else {
    }
    return
  }
  func.func @transform_0(%arg0: i32, %arg1: i32) -> (i32, i32, i32, i32) {
    %c0_i32 = arith.constant 0 : i32
    %c0_i32_0 = arith.constant 0 : i32
    %c0_i32_1 = arith.constant 0 : i32
    %c0_i32_2 = arith.constant 0 : i32
    %c0_i32_3 = arith.constant 0 : i32
    return %c0_i32, %c0_i32_0, %c0_i32_1, %c0_i32_2 : i32, i32, i32, i32
  }
  func.func @transform_1(%arg0: i32, %arg1: i32) -> (i32, i32, i32) {
    %c0_i32 = arith.constant 0 : i32
    %c0_i32_0 = arith.constant 0 : i32
    return %arg1, %c0_i32, %arg0 : i32, i32, i32
  }
  func.func @transform_2(%arg0: i32, %arg1: i32) -> (i32, i32) {
    %c0_i32 = arith.constant 0 : i32
    %c0_i32_0 = arith.constant 0 : i32
    return %c0_i32, %arg0 : i32, i32
  }
  func.func @transform_3(%arg0: i32, %arg1: i32) -> (i32, i32) {
    %c0_i32 = arith.constant 0 : i32
    %c0_i32_0 = arith.constant 0 : i32
    return %c0_i32, %arg0 : i32, i32
  }
  func.func @transform_4(%arg0: i32, %arg1: i32) -> (i32, i32) {
    %c0_i32 = arith.constant 0 : i32
    %c0_i32_0 = arith.constant 0 : i32
    return %c0_i32, %arg0 : i32, i32
  }
}

</mosaic_0001>

<llo_original>
// kernel: _layer4_forward_impl.1
$region0: #{_layer4_forward_impl.1}
  #allocation0 [shape = 'u32[]', space=smem, size = 0x4, offset = 0x4, fixed_abs, tag = 'smem constant byte address 0x4 - core index']
  #allocation1 [shape = 'u32[144,128]{1,0:T(1,128)}', space=vmem, size = 0x12000, scoped, tag = 'internal scratch']
  #allocation2 [shape = 'f32[128,128]{1,0:T(8,128)}', space=vmem, size = 0x10000, scoped, tag = 'scratch operand']
  %s0 = inlined_call_operand.vmem [shape: f32[2,12,12,128], index: 0, kind: input, shape index: {}]
  %s1 = inlined_call_operand.vmem [shape: f32[5,640,256], index: 1, kind: input, shape index: {}]
  %s2 = inlined_call_operand.vmem [shape: f32[1,256], index: 2, kind: input, shape index: {}]
  %s3 = inlined_call_operand.vmem [shape: f32[1,256], index: 3, kind: input, shape index: {}]
  %s4 = inlined_call_operand.hbm [shape: f32[128,256], index: 4, kind: output, shape index: {}]
  %s5 = sld [smem:[#allocation0]]
  $region95: #{_layer4_forward_impl.1} parent=0
    _
  %s7 = ssub.s32 1, %s5
  %s8 = scalar_select 0, %s7, %s5
  $region1: #{_layer4_forward_impl.1} parent=0
    #allocation3 [shape = 'u8[655360]{0}', space=vmem, size = 0xa0000, scoped, tag = 'input window, operand 1']
    #allocation4 [shape = 'u8[131072]{0}', space=vmem, size = 0x20000, scoped, tag = 'output window, operand 0']
    #allocation5 [shape = 's32[2]{0}', space=sflag, size = 0x8, scoped, tag = 'scoped memory for _layer4_forward_impl.1']
    %9 = vsyncpa [#allocation5], 0
    %s10 = scalar_lea.sflag [#allocation5], 1
    %11 = vsyncpa %s10, 0
    loop: start=0, step=1, limit=12
    $region2: #{_layer4_forward_impl.1} parent=1 // loop_pre_header
      _
    $region3: #{_layer4_forward_impl.1} parent=1 // loop_header
      %s13 = sphi 0, %s17
      %p14 = scmp.ge.s32.totalorder %s13, 12
      %s20 = sphi 0, %s32
      %s21 = sphi 0, %s28
      %s22 = sphi 0, %s20
      %s23 = sphi 0, %s21
      %s24 = sphi 0, %s22
      %s25 = sphi 0, %s23
      %s33 = sphi 0, %s33
      %s35 = sphi 0, %s33
      %s36 = sphi 0, %s35
      %s50 = sphi 0, %s36
      %s58 = sphi 0, %s60
      %s61 = sphi 0, %s58
      %s62 = sphi 0, %s61
      %s78 = sphi 0, %s62
      %s84 = sphi 0, %s86
      %s87 = sphi 0, %s84
      %s88 = sphi 0, %s87
      %s104 = sphi 0, %s88
      %s110 = sphi 0, %s112
      %s113 = sphi 0, %s110
      %s114 = sphi 0, %s113
      %s130 = sphi 0, %s114
      %s136 = sphi 0, %s138
      %s139 = sphi 0, %s136
      %s140 = sphi 0, %s139
      %s156 = sphi 0, %s140
    $region4: #{_layer4_forward_impl.1} parent=1 // loop_header_branch
      %16 = sbr.rel (%p14) target = $region8
    $region5: #{_layer4_forward_impl.1} parent=1 // loop_body
      %s18 = ssub.s32 %s13, 1
      %s19 = ssub.s32 %s13, 2
      %s26 = sadd.s32 1, %s21
      %p27 = scmp.ge.s32.totalorder %s26, 5
      %s28 = scalar_select %p27, 0, %s26
      %s29 = sadd.s32 1, %s20
      %s30 = scalar_select %p27, %s29, %s20
      %p31 = scmp.ge.s32.totalorder %s30, 2
      %s32 = scalar_select %p31, 0, %s30
      %s34 = sadd.s32 %s33, 1
      %p37 = scmp.eq.s32.totalorder %s13, 9
      %p38 = scmp.ne.s32.totalorder %s33, %s35
      %p39 = scmp.eq.s32.totalorder %s13, 0
      %p40 = por %p38, %p39
      %p41 = scmp.ne.s32.totalorder %s33, %s35
      %p42 = scmp.eq.s32.totalorder %s18, 9
      %p43 = por %p41, %p42
      %p44 = scmp.ne.s32.totalorder %s35, %s36
      %p45 = scmp.eq.s32.totalorder %s18, 0
      %p46 = por %p44, %p45
      %p47 = scmp.ne.s32.totalorder %s35, %s36
      %p48 = scmp.eq.s32.totalorder %s19, 9
      %p49 = por %p47, %p48
      %p51 = scmp.ne.s32.totalorder %s36, %s50
      %p52 = scmp.eq.s32.totalorder %s19, 0
      %p53 = por %p51, %p52
      %s54 = ssub.s32 %s21, %s28
      %s55 = ssub.s32 %s20, %s32
      %s56 = sor.u32 %s54, %s55
      %p57 = scmp.eq.s32.totalorder %s56, 0
      %s59 = sadd.s32 %s58, 1
      %s60 = scalar_select %p57, %s58, %s59
      %p63 = pneg %p57
      %p64 = scmp.eq.s32.totalorder %s13, 9
      %p65 = por %p63, %p64
      %p66 = scmp.ne.s32.totalorder %s58, %s61
      %p67 = scmp.eq.s32.totalorder %s13, 0
      %p68 = por %p66, %p67
      %p69 = scmp.ne.s32.totalorder %s58, %s61
      %p70 = scmp.eq.s32.totalorder %s18, 9
      %p71 = por %p69, %p70
      %p72 = scmp.ne.s32.totalorder %s61, %s62
      %p73 = scmp.eq.s32.totalorder %s18, 0
      %p74 = por %p72, %p73
      %p75 = scmp.ne.s32.totalorder %s61, %s62
      %p76 = scmp.eq.s32.totalorder %s19, 9
      %p77 = por %p75, %p76
      %p79 = scmp.ne.s32.totalorder %s62, %s78
      %p80 = scmp.eq.s32.totalorder %s19, 0
      %p81 = por %p79, %p80
      %s82 = ssub.s32 %s20, %s32
      %p83 = scmp.eq.s32.totalorder %s82, 0
      %s85 = sadd.s32 %s84, 1
      %s86 = scalar_select %p83, %s84, %s85
      %p89 = pneg %p83
      %p90 = scmp.eq.s32.totalorder %s13, 9
      %p91 = por %p89, %p90
      %p92 = scmp.ne.s32.totalorder %s84, %s87
      %p93 = scmp.eq.s32.totalorder %s13, 0
      %p94 = por %p92, %p93
      %p95 = scmp.ne.s32.totalorder %s84, %s87
      %p96 = scmp.eq.s32.totalorder %s18, 9
      %p97 = por %p95, %p96
      %p98 = scmp.ne.s32.totalorder %s87, %s88
      %p99 = scmp.eq.s32.totalorder %s18, 0
      %p100 = por %p98, %p99
      %p101 = scmp.ne.s32.totalorder %s87, %s88
      %p102 = scmp.eq.s32.totalorder %s19, 9
      %p103 = por %p101, %p102
      %p105 = scmp.ne.s32.totalorder %s88, %s104
      %p106 = scmp.eq.s32.totalorder %s19, 0
      %p107 = por %p105, %p106
      %s108 = ssub.s32 %s20, %s32
      %p109 = scmp.eq.s32.totalorder %s108, 0
      %s111 = sadd.s32 %s110, 1
      %s112 = scalar_select %p109, %s110, %s111
      %p115 = pneg %p109
      %p116 = scmp.eq.s32.totalorder %s13, 9
      %p117 = por %p115, %p116
      %p118 = scmp.ne.s32.totalorder %s110, %s113
      %p119 = scmp.eq.s32.totalorder %s13, 0
      %p120 = por %p118, %p119
      %p121 = scmp.ne.s32.totalorder %s110, %s113
      %p122 = scmp.eq.s32.totalorder %s18, 9
      %p123 = por %p121, %p122
      %p124 = scmp.ne.s32.totalorder %s113, %s114
      %p125 = scmp.eq.s32.totalorder %s18, 0
      %p126 = por %p124, %p125
      %p127 = scmp.ne.s32.totalorder %s113, %s114
      %p128 = scmp.eq.s32.totalorder %s19, 9
      %p129 = por %p127, %p128
      %p131 = scmp.ne.s32.totalorder %s114, %s130
      %p132 = scmp.eq.s32.totalorder %s19, 0
      %p133 = por %p131, %p132
      %s134 = ssub.s32 %s20, %s32
      %p135 = scmp.eq.s32.totalorder %s134, 0
      %s137 = sadd.s32 %s136, 1
      %s138 = scalar_select %p135, %s136, %s137
      %p141 = pneg %p135
      %p142 = scmp.eq.s32.totalorder %s13, 9
      %p143 = por %p141, %p142
      %p144 = scmp.ne.s32.totalorder %s136, %s139
      %p145 = scmp.eq.s32.totalorder %s13, 0
      %p146 = por %p144, %p145
      %p147 = scmp.ne.s32.totalorder %s136, %s139
      %p148 = scmp.eq.s32.totalorder %s18, 9
      %p149 = por %p147, %p148
      %p150 = scmp.ne.s32.totalorder %s139, %s140
      %p151 = scmp.eq.s32.totalorder %s18, 0
      %p152 = por %p150, %p151
      %p153 = scmp.ne.s32.totalorder %s139, %s140
      %p154 = scmp.eq.s32.totalorder %s19, 9
      %p155 = por %p153, %p154
      %p157 = scmp.ne.s32.totalorder %s140, %s156
      %p158 = scmp.eq.s32.totalorder %s19, 0
      %p159 = por %p157, %p158
      %p160 = scmp.le.s32.totalorder 1, %s13
      %p161 = scmp.lt.s32.totalorder %s13, 11
      %p162 = pnand %p160, %p161
      %p163 = pneg %p162
      // Predicated region
      $region9: #{_layer4_forward_impl.1} parent=5 // pred_check
        _
      $region10: #{_layer4_forward_impl.1} parent=5 // pred_check_branch
        %165 = sbr.rel (%p162) target = $region12
      $region11: #{_layer4_forward_impl.1} parent=5 // pred_region
        %s166 = ssub.s32 %s13, 1
        // Predicated region
        $region13: #{_layer4_forward_impl.1} parent=11 // pred_check
          %p167 = pneg %p46
        $region14: #{_layer4_forward_impl.1} parent=11 // pred_check_branch
          %169 = sbr.rel (%p167) target = $region16
        $region15: #{_layer4_forward_impl.1} parent=11 // pred_region
          _
        $region16: #{_layer4_forward_impl.1} parent=11 // pred_fallthru
          _
      $region12: #{_layer4_forward_impl.1} parent=5 // pred_fallthru
        _
      %p170 = scmp.lt.s32.totalorder %s13, 10
      // Predicated region
      $region17: #{_layer4_forward_impl.1} parent=5 // pred_check
        %p171 = pneg %p170
      $region18: #{_layer4_forward_impl.1} parent=5 // pred_check_branch
        %173 = sbr.rel (%p171) target = $region20
      $region19: #{_layer4_forward_impl.1} parent=5 // pred_region
        // Predicated region
        $region21: #{_layer4_forward_impl.1} parent=19 // pred_check
          %p174 = pneg %p68
        $region22: #{_layer4_forward_impl.1} parent=19 // pred_check_branch
          %176 = sbr.rel (%p174) target = $region24
        $region23: #{_layer4_forward_impl.1} parent=19 // pred_region
          %s177 = sand.u32 %s58, 1
          %s178 = sand.u32 %s58, 1
          %s179 = smul.addr %s178, 640
          %s180 = scalar_lea.vmem [#allocation3], %s179
          %s181 = smul.addr %s21, 160
          %s182 = sadd.s32 %s20, %s181
          %s183 = smul.addr %s182, 8
          %s184 = scalar_lea.vmem %s1, %s183
          // Predicated region
          $region25: #{_layer4_forward_impl.1} parent=23 // pred_check
            _
          $region26: #{_layer4_forward_impl.1} parent=23 // pred_check_branch
            %186 = sbr.rel (0) target = $region28
          $region27: #{_layer4_forward_impl.1} parent=23 // pred_region
            // Predicated region
            $region29: #{_layer4_forward_impl.1} parent=27 // pred_check
              _
            $region30: #{_layer4_forward_impl.1} parent=27 // pred_check_branch
              %188 = sbr.rel (0) target = $region32
            $region31: #{_layer4_forward_impl.1} parent=27 // pred_region
              // Predicated region
              $region44: #{_layer4_forward_impl.1} parent=31 // pred_check
                _
              $region45: #{_layer4_forward_impl.1} parent=31 // pred_check_branch
                %361 = sbr.rel (0) target = $region47
              $region46: #{_layer4_forward_impl.1} parent=31 // pred_region
                loop: start=0, step=1, limit=1
                $region48: #{_layer4_forward_impl.1} parent=46 // loop_pre_header
                  _
                $region49: #{_layer4_forward_impl.1} parent=46 // loop_header
                  %s363 = sphi 0, %s367
                  %p364 = scmp.ge.s32.totalorder %s363, 1
                  %s368 = sphi %s184, %s184
                  %s369 = sphi %s180, %s180
                $region50: #{_layer4_forward_impl.1} parent=46 // loop_header_branch
                  %366 = sbr.rel (%p364) target = $region54
                $region51: #{_layer4_forward_impl.1} parent=46 // loop_body
                  %v370 = vld [vmem:[%s368] sm:$0xff]
                  %371 = vst [vmem:[%s369] sm:$0xff] %v370
                  %v372 = vld [vmem:[%s368 + $0x10] sm:$0xff]
                  %373 = vst [vmem:[%s369 + $0x8] sm:$0xff] %v372
                  %v374 = vld [vmem:[%s368 + $0x20] sm:$0xff]
                  %375 = vst [vmem:[%s369 + $0x10] sm:$0xff] %v374
                  %v376 = vld [vmem:[%s368 + $0x30] sm:$0xff]
                  %377 = vst [vmem:[%s369 + $0x18] sm:$0xff] %v376
                  %v378 = vld [vmem:[%s368 + $0x40] sm:$0xff]
                  %379 = vst [vmem:[%s369 + $0x20] sm:$0xff] %v378
                  %v380 = vld [vmem:[%s368 + $0x50] sm:$0xff]
                  %381 = vst [vmem:[%s369 + $0x28] sm:$0xff] %v380
                  %v382 = vld [vmem:[%s368 + $0x60] sm:$0xff]
                  %383 = vst [vmem:[%s369 + $0x30] sm:$0xff] %v382
                  %v384 = vld [vmem:[%s368 + $0x70] sm:$0xff]
                  %385 = vst [vmem:[%s369 + $0x38] sm:$0xff] %v384
                  %v386 = vld [vmem:[%s368 + $0x80] sm:$0xff]
                  %387 = vst [vmem:[%s369 + $0x40] sm:$0xff] %v386
                  %v388 = vld [vmem:[%s368 + $0x90] sm:$0xff]
                  %389 = vst [vmem:[%s369 + $0x48] sm:$0xff] %v388
                  %v390 = vld [vmem:[%s368 + $0xa0] sm:$0xff]
                  %391 = vst [vmem:[%s369 + $0x50] sm:$0xff] %v390
                  %v392 = vld [vmem:[%s368 + $0xb0] sm:$0xff]
                  %393 = vst [vmem:[%s369 + $0x58] sm:$0xff] %v392
                  %v394 = vld [vmem:[%s368 + $0xc0] sm:$0xff]
                  %395 = vst [vmem:[%s369 + $0x60] sm:$0xff] %v394
                  %v396 = vld [vmem:[%s368 + $0xd0] sm:$0xff]
                  %397 = vst [vmem:[%s369 + $0x68] sm:$0xff] %v396
                  %v398 = vld [vmem:[%s368 + $0xe0] sm:$0xff]
                  %399 = vst [vmem:[%s369 + $0x70] sm:$0xff] %v398
                  %v400 = vld [vmem:[%s368 + $0xf0] sm:$0xff]
                  %401 = vst [vmem:[%s369 + $0x78] sm:$0xff] %v400
                  %v402 = vld [vmem:[%s368 + $0x100] sm:$0xff]
                  %403 = vst [vmem:[%s369 + $0x80] sm:$0xff] %v402
                  %v404 = vld [vmem:[%s368 + $0x110] sm:$0xff]
                  %405 = vst [vmem:[%s369 + $0x88] sm:$0xff] %v404
                  %v406 = vld [vmem:[%s368 + $0x120] sm:$0xff]
                  %407 = vst [vmem:[%s369 + $0x90] sm:$0xff] %v406
                  %v408 = vld [vmem:[%s368 + $0x130] sm:$0xff]
                  %409 = vst [vmem:[%s369 + $0x98] sm:$0xff] %v408
                  %v410 = vld [vmem:[%s368 + $0x140] sm:$0xff]
                  %411 = vst [vmem:[%s369 + $0xa0] sm:$0xff] %v410
                  %v412 = vld [vmem:[%s368 + $0x150] sm:$0xff]
                  %413 = vst [vmem:[%s369 + $0xa8] sm:$0xff] %v412
                  %v414 = vld [vmem:[%s368 + $0x160] sm:$0xff]
                  %415 = vst [vmem:[%s369 + $0xb0] sm:$0xff] %v414
                  %v416 = vld [vmem:[%s368 + $0x170] sm:$0xff]
                  %417 = vst [vmem:[%s369 + $0xb8] sm:$0xff] %v416
                  %v418 = vld [vmem:[%s368 + $0x180] sm:$0xff]
                  %419 = vst [vmem:[%s369 + $0xc0] sm:$0xff] %v418
                  %v420 = vld [vmem:[%s368 + $0x190] sm:$0xff]
                  %421 = vst [vmem:[%s369 + $0xc8] sm:$0xff] %v420
                  %v422 = vld [vmem:[%s368 + $0x1a0] sm:$0xff]
                  %423 = vst [vmem:[%s369 + $0xd0] sm:$0xff] %v422
                  %v424 = vld [vmem:[%s368 + $0x1b0] sm:$0xff]
                  %425 = vst [vmem:[%s369 + $0xd8] sm:$0xff] %v424
                  %v426 = vld [vmem:[%s368 + $0x1c0] sm:$0xff]
                  %427 = vst [vmem:[%s369 + $0xe0] sm:$0xff] %v426
                  %v428 = vld [vmem:[%s368 + $0x1d0] sm:$0xff]
                  %429 = vst [vmem:[%s369 + $0xe8] sm:$0xff] %v428
                  %v430 = vld [vmem:[%s368 + $0x1e0] sm:$0xff]
                  %431 = vst [vmem:[%s369 + $0xf0] sm:$0xff] %v430
                  %v432 = vld [vmem:[%s368 + $0x1f0] sm:$0xff]
                  %433 = vst [vmem:[%s369 + $0xf8] sm:$0xff] %v432
                  %v434 = vld [vmem:[%s368 + $0x200] sm:$0xff]
                  %435 = vst [vmem:[%s369 + $0x100] sm:$0xff] %v434
                  %v436 = vld [vmem:[%s368 + $0x210] sm:$0xff]
                  %437 = vst [vmem:[%s369 + $0x108] sm:$0xff] %v436
                  %v438 = vld [vmem:[%s368 + $0x220] sm:$0xff]
                  %439 = vst [vmem:[%s369 + $0x110] sm:$0xff] %v438
                  %v440 = vld [vmem:[%s368 + $0x230] sm:$0xff]
                  %441 = vst [vmem:[%s369 + $0x118] sm:$0xff] %v440
                  %v442 = vld [vmem:[%s368 + $0x240] sm:$0xff]
                  %443 = vst [vmem:[%s369 + $0x120] sm:$0xff] %v442
                  %v444 = vld [vmem:[%s368 + $0x250] sm:$0xff]
                  %445 = vst [vmem:[%s369 + $0x128] sm:$0xff] %v444
                  %v446 = vld [vmem:[%s368 + $0x260] sm:$0xff]
                  %447 = vst [vmem:[%s369 + $0x130] sm:$0xff] %v446
                  %v448 = vld [vmem:[%s368 + $0x270] sm:$0xff]
                  %449 = vst [vmem:[%s369 + $0x138] sm:$0xff] %v448
                  %v450 = vld [vmem:[%s368 + $0x280] sm:$0xff]
                  %451 = vst [vmem:[%s369 + $0x140] sm:$0xff] %v450
                  %v452 = vld [vmem:[%s368 + $0x290] sm:$0xff]
                  %453 = vst [vmem:[%s369 + $0x148] sm:$0xff] %v452
                  %v454 = vld [vmem:[%s368 + $0x2a0] sm:$0xff]
                  %455 = vst [vmem:[%s369 + $0x150] sm:$0xff] %v454
                  %v456 = vld [vmem:[%s368 + $0x2b0] sm:$0xff]
                  %457 = vst [vmem:[%s369 + $0x158] sm:$0xff] %v456
                  %v458 = vld [vmem:[%s368 + $0x2c0] sm:$0xff]
                  %459 = vst [vmem:[%s369 + $0x160] sm:$0xff] %v458
                  %v460 = vld [vmem:[%s368 + $0x2d0] sm:$0xff]
                  %461 = vst [vmem:[%s369 + $0x168] sm:$0xff] %v460
                  %v462 = vld [vmem:[%s368 + $0x2e0] sm:$0xff]
                  %463 = vst [vmem:[%s369 + $0x170] sm:$0xff] %v462
                  %v464 = vld [vmem:[%s368 + $0x2f0] sm:$0xff]
                  %465 = vst [vmem:[%s369 + $0x178] sm:$0xff] %v464
                  %v466 = vld [vmem:[%s368 + $0x300] sm:$0xff]
                  %467 = vst [vmem:[%s369 + $0x180] sm:$0xff] %v466
                  %v468 = vld [vmem:[%s368 + $0x310] sm:$0xff]
                  %469 = vst [vmem:[%s369 + $0x188] sm:$0xff] %v468
                  %v470 = vld [vmem:[%s368 + $0x320] sm:$0xff]
                  %471 = vst [vmem:[%s369 + $0x190] sm:$0xff] %v470
                  %v472 = vld [vmem:[%s368 + $0x330] sm:$0xff]
                  %473 = vst [vmem:[%s369 + $0x198] sm:$0xff] %v472
                  %v474 = vld [vmem:[%s368 + $0x340] sm:$0xff]
                  %475 = vst [vmem:[%s369 + $0x1a0] sm:$0xff] %v474
                  %v476 = vld [vmem:[%s368 + $0x350] sm:$0xff]
                  %477 = vst [vmem:[%s369 + $0x1a8] sm:$0xff] %v476
                  %v478 = vld [vmem:[%s368 + $0x360] sm:$0xff]
                  %479 = vst [vmem:[%s369 + $0x1b0] sm:$0xff] %v478
                  %v480 = vld [vmem:[%s368 + $0x370] sm:$0xff]
                  %481 = vst [vmem:[%s369 + $0x1b8] sm:$0xff] %v480
                  %v482 = vld [vmem:[%s368 + $0x380] sm:$0xff]
                  %483 = vst [vmem:[%s369 + $0x1c0] sm:$0xff] %v482
                  %v484 = vld [vmem:[%s368 + $0x390] sm:$0xff]
                  %485 = vst [vmem:[%s369 + $0x1c8] sm:$0xff] %v484
                  %v486 = vld [vmem:[%s368 + $0x3a0] sm:$0xff]
                  %487 = vst [vmem:[%s369 + $0x1d0] sm:$0xff] %v486
                  %v488 = vld [vmem:[%s368 + $0x3b0] sm:$0xff]
                  %489 = vst [vmem:[%s369 + $0x1d8] sm:$0xff] %v488
                  %v490 = vld [vmem:[%s368 + $0x3c0] sm:$0xff]
                  %491 = vst [vmem:[%s369 + $0x1e0] sm:$0xff] %v490
                  %v492 = vld [vmem:[%s368 + $0x3d0] sm:$0xff]
                  %493 = vst [vmem:[%s369 + $0x1e8] sm:$0xff] %v492
                  %v494 = vld [vmem:[%s368 + $0x3e0] sm:$0xff]
                  %495 = vst [vmem:[%s369 + $0x1f0] sm:$0xff] %v494
                  %v496 = vld [vmem:[%s368 + $0x3f0] sm:$0xff]
                  %497 = vst [vmem:[%s369 + $0x1f8] sm:$0xff] %v496
                  %v498 = vld [vmem:[%s368 + $0x400] sm:$0xff]
                  %499 = vst [vmem:[%s369 + $0x200] sm:$0xff] %v498
                  %v500 = vld [vmem:[%s368 + $0x410] sm:$0xff]
                  %501 = vst [vmem:[%s369 + $0x208] sm:$0xff] %v500
                  %v502 = vld [vmem:[%s368 + $0x420] sm:$0xff]
                  %503 = vst [vmem:[%s369 + $0x210] sm:$0xff] %v502
                  %v504 = vld [vmem:[%s368 + $0x430] sm:$0xff]
                  %505 = vst [vmem:[%s369 + $0x218] sm:$0xff] %v504
                  %v506 = vld [vmem:[%s368 + $0x440] sm:$0xff]
                  %507 = vst [vmem:[%s369 + $0x220] sm:$0xff] %v506
                  %v508 = vld [vmem:[%s368 + $0x450] sm:$0xff]
                  %509 = vst [vmem:[%s369 + $0x228] sm:$0xff] %v508
                  %v510 = vld [vmem:[%s368 + $0x460] sm:$0xff]
                  %511 = vst [vmem:[%s369 + $0x230] sm:$0xff] %v510
                  %v512 = vld [vmem:[%s368 + $0x470] sm:$0xff]
                  %513 = vst [vmem:[%s369 + $0x238] sm:$0xff] %v512
                  %v514 = vld [vmem:[%s368 + $0x480] sm:$0xff]
                  %515 = vst [vmem:[%s369 + $0x240] sm:$0xff] %v514
                  %v516 = vld [vmem:[%s368 + $0x490] sm:$0xff]
                  %517 = vst [vmem:[%s369 + $0x248] sm:$0xff] %v516
                  %v518 = vld [vmem:[%s368 + $0x4a0] sm:$0xff]
                  %519 = vst [vmem:[%s369 + $0x250] sm:$0xff] %v518
                  %v520 = vld [vmem:[%s368 + $0x4b0] sm:$0xff]
                  %521 = vst [vmem:[%s369 + $0x258] sm:$0xff] %v520
                  %v522 = vld [vmem:[%s368 + $0x4c0] sm:$0xff]
                  %523 = vst [vmem:[%s369 + $0x260] sm:$0xff] %v522
                  %v524 = vld [vmem:[%s368 + $0x4d0] sm:$0xff]
                  %525 = vst [vmem:[%s369 + $0x268] sm:$0xff] %v524
                  %v526 = vld [vmem:[%s368 + $0x4e0] sm:$0xff]
                  %527 = vst [vmem:[%s369 + $0x270] sm:$0xff] %v526
                  %v528 = vld [vmem:[%s368 + $0x4f0] sm:$0xff]
                  %529 = vst [vmem:[%s369 + $0x278] sm:$0xff] %v528
                $region52: #{_layer4_forward_impl.1} parent=46 // loop_footer
                  %s367 = sadd.s32 1, %s363
                $region53: #{_layer4_forward_impl.1} parent=46 // loop_footer_branch
                  %362 = sbr.rel target = $region49
                $region54: #{_layer4_forward_impl.1} parent=46 // loop_exit
                  _
              $region47: #{_layer4_forward_impl.1} parent=31 // pred_fallthru
                _
              // Predicated region
              $region55: #{_layer4_forward_impl.1} parent=31 // pred_check
                _
              $region56: #{_layer4_forward_impl.1} parent=31 // pred_check_branch
                %531 = sbr.rel target = $region58
              $region57: #{_layer4_forward_impl.1} parent=31 // pred_region
                _
              $region58: #{_layer4_forward_impl.1} parent=31 // pred_fallthru
                _
            $region32: #{_layer4_forward_impl.1} parent=27 // pred_fallthru
              _
            // Predicated region
            $region33: #{_layer4_forward_impl.1} parent=27 // pred_check
              _
            $region34: #{_layer4_forward_impl.1} parent=27 // pred_check_branch
              %190 = sbr.rel target = $region36
            $region35: #{_layer4_forward_impl.1} parent=27 // pred_region
              loop: start=0, step=1, limit=1
              $region37: #{_layer4_forward_impl.1} parent=35 // loop_pre_header
                _
              $region38: #{_layer4_forward_impl.1} parent=35 // loop_header
                %s193 = sphi 0, %s197
                %p194 = scmp.ge.s32.totalorder %s193, 1
                %s198 = sphi %s184, %s184
                %s199 = sphi %s180, %s180
              $region39: #{_layer4_forward_impl.1} parent=35 // loop_header_branch
                %196 = sbr.rel (%p194) target = $region43
              $region40: #{_layer4_forward_impl.1} parent=35 // loop_body
                %v200 = vld [vmem:[%s198] sm:$0xff]
                %201 = vst [vmem:[%s199] sm:$0xff] %v200
                %v202 = vld [vmem:[%s198 + $0x10] sm:$0xff]
                %203 = vst [vmem:[%s199 + $0x8] sm:$0xff] %v202
                %v204 = vld [vmem:[%s198 + $0x20] sm:$0xff]
                %205 = vst [vmem:[%s199 + $0x10] sm:$0xff] %v204
                %v206 = vld [vmem:[%s198 + $0x30] sm:$0xff]
                %207 = vst [vmem:[%s199 + $0x18] sm:$0xff] %v206
                %v208 = vld [vmem:[%s198 + $0x40] sm:$0xff]
                %209 = vst [vmem:[%s199 + $0x20] sm:$0xff] %v208
                %v210 = vld [vmem:[%s198 + $0x50] sm:$0xff]
                %211 = vst [vmem:[%s199 + $0x28] sm:$0xff] %v210
                %v212 = vld [vmem:[%s198 + $0x60] sm:$0xff]
                %213 = vst [vmem:[%s199 + $0x30] sm:$0xff] %v212
                %v214 = vld [vmem:[%s198 + $0x70] sm:$0xff]
                %215 = vst [vmem:[%s199 + $0x38] sm:$0xff] %v214
                %v216 = vld [vmem:[%s198 + $0x80] sm:$0xff]
                %217 = vst [vmem:[%s199 + $0x40] sm:$0xff] %v216
                %v218 = vld [vmem:[%s198 + $0x90] sm:$0xff]
                %219 = vst [vmem:[%s199 + $0x48] sm:$0xff] %v218
                %v220 = vld [vmem:[%s198 + $0xa0] sm:$0xff]
                %221 = vst [vmem:[%s199 + $0x50] sm:$0xff] %v220
                %v222 = vld [vmem:[%s198 + $0xb0] sm:$0xff]
                %223 = vst [vmem:[%s199 + $0x58] sm:$0xff] %v222
                %v224 = vld [vmem:[%s198 + $0xc0] sm:$0xff]
                %225 = vst [vmem:[%s199 + $0x60] sm:$0xff] %v224
                %v226 = vld [vmem:[%s198 + $0xd0] sm:$0xff]
                %227 = vst [vmem:[%s199 + $0x68] sm:$0xff] %v226
                %v228 = vld [vmem:[%s198 + $0xe0] sm:$0xff]
                %229 = vst [vmem:[%s199 + $0x70] sm:$0xff] %v228
                %v230 = vld [vmem:[%s198 + $0xf0] sm:$0xff]
                %231 = vst [vmem:[%s199 + $0x78] sm:$0xff] %v230
                %v232 = vld [vmem:[%s198 + $0x100] sm:$0xff]
                %233 = vst [vmem:[%s199 + $0x80] sm:$0xff] %v232
                %v234 = vld [vmem:[%s198 + $0x110] sm:$0xff]
                %235 = vst [vmem:[%s199 + $0x88] sm:$0xff] %v234
                %v236 = vld [vmem:[%s198 + $0x120] sm:$0xff]
                %237 = vst [vmem:[%s199 + $0x90] sm:$0xff] %v236
                %v238 = vld [vmem:[%s198 + $0x130] sm:$0xff]
                %239 = vst [vmem:[%s199 + $0x98] sm:$0xff] %v238
                %v240 = vld [vmem:[%s198 + $0x140] sm:$0xff]
                %241 = vst [vmem:[%s199 + $0xa0] sm:$0xff] %v240
                %v242 = vld [vmem:[%s198 + $0x150] sm:$0xff]
                %243 = vst [vmem:[%s199 + $0xa8] sm:$0xff] %v242
                %v244 = vld [vmem:[%s198 + $0x160] sm:$0xff]
                %245 = vst [vmem:[%s199 + $0xb0] sm:$0xff] %v244
                %v246 = vld [vmem:[%s198 + $0x170] sm:$0xff]
                %247 = vst [vmem:[%s199 + $0xb8] sm:$0xff] %v246
                %v248 = vld [vmem:[%s198 + $0x180] sm:$0xff]
                %249 = vst [vmem:[%s199 + $0xc0] sm:$0xff] %v248
                %v250 = vld [vmem:[%s198 + $0x190] sm:$0xff]
                %251 = vst [vmem:[%s199 + $0xc8] sm:$0xff] %v250
                %v252 = vld [vmem:[%s198 + $0x1a0] sm:$0xff]
                %253 = vst [vmem:[%s199 + $0xd0] sm:$0xff] %v252
                %v254 = vld [vmem:[%s198 + $0x1b0] sm:$0xff]
                %255 = vst [vmem:[%s199 + $0xd8] sm:$0xff] %v254
                %v256 = vld [vmem:[%s198 + $0x1c0] sm:$0xff]
                %257 = vst [vmem:[%s199 + $0xe0] sm:$0xff] %v256
                %v258 = vld [vmem:[%s198 + $0x1d0] sm:$0xff]
                %259 = vst [vmem:[%s199 + $0xe8] sm:$0xff] %v258
                %v260 = vld [vmem:[%s198 + $0x1e0] sm:$0xff]
                %261 = vst [vmem:[%s199 + $0xf0] sm:$0xff] %v260
                %v262 = vld [vmem:[%s198 + $0x1f0] sm:$0xff]
                %263 = vst [vmem:[%s199 + $0xf8] sm:$0xff] %v262
                %v264 = vld [vmem:[%s198 + $0x200] sm:$0xff]
                %265 = vst [vmem:[%s199 + $0x100] sm:$0xff] %v264
                %v266 = vld [vmem:[%s198 + $0x210] sm:$0xff]
                %267 = vst [vmem:[%s199 + $0x108] sm:$0xff] %v266
                %v268 = vld [vmem:[%s198 + $0x220] sm:$0xff]
                %269 = vst [vmem:[%s199 + $0x110] sm:$0xff] %v268
                %v270 = vld [vmem:[%s198 + $0x230] sm:$0xff]
                %271 = vst [vmem:[%s199 + $0x118] sm:$0xff] %v270
                %v272 = vld [vmem:[%s198 + $0x240] sm:$0xff]
                %273 = vst [vmem:[%s199 + $0x120] sm:$0xff] %v272
                %v274 = vld [vmem:[%s198 + $0x250] sm:$0xff]
                %275 = vst [vmem:[%s199 + $0x128] sm:$0xff] %v274
                %v276 = vld [vmem:[%s198 + $0x260] sm:$0xff]
                %277 = vst [vmem:[%s199 + $0x130] sm:$0xff] %v276
                %v278 = vld [vmem:[%s198 + $0x270] sm:$0xff]
                %279 = vst [vmem:[%s199 + $0x138] sm:$0xff] %v278
                %v280 = vld [vmem:[%s198 + $0x280] sm:$0xff]
                %281 = vst [vmem:[%s199 + $0x140] sm:$0xff] %v280
                %v282 = vld [vmem:[%s198 + $0x290] sm:$0xff]
                %283 = vst [vmem:[%s199 + $0x148] sm:$0xff] %v282
                %v284 = vld [vmem:[%s198 + $0x2a0] sm:$0xff]
                %285 = vst [vmem:[%s199 + $0x150] sm:$0xff] %v284
                %v286 = vld [vmem:[%s198 + $0x2b0] sm:$0xff]
                %287 = vst [vmem:[%s199 + $0x158] sm:$0xff] %v286
                %v288 = vld [vmem:[%s198 + $0x2c0] sm:$0xff]
                %289 = vst [vmem:[%s199 + $0x160] sm:$0xff] %v288
                %v290 = vld [vmem:[%s198 + $0x2d0] sm:$0xff]
                %291 = vst [vmem:[%s199 + $0x168] sm:$0xff] %v290
                %v292 = vld [vmem:[%s198 + $0x2e0] sm:$0xff]
                %293 = vst [vmem:[%s199 + $0x170] sm:$0xff] %v292
                %v294 = vld [vmem:[%s198 + $0x2f0] sm:$0xff]
                %295 = vst [vmem:[%s199 + $0x178] sm:$0xff] %v294
                %v296 = vld [vmem:[%s198 + $0x300] sm:$0xff]
                %297 = vst [vmem:[%s199 + $0x180] sm:$0xff] %v296
                %v298 = vld [vmem:[%s198 + $0x310] sm:$0xff]
                %299 = vst [vmem:[%s199 + $0x188] sm:$0xff] %v298
                %v300 = vld [vmem:[%s198 + $0x320] sm:$0xff]
                %301 = vst [vmem:[%s199 + $0x190] sm:$0xff] %v300
                %v302 = vld [vmem:[%s198 + $0x330] sm:$0xff]
                %303 = vst [vmem:[%s199 + $0x198] sm:$0xff] %v302
                %v304 = vld [vmem:[%s198 + $0x340] sm:$0xff]
                %305 = vst [vmem:[%s199 + $0x1a0] sm:$0xff] %v304
                %v306 = vld [vmem:[%s198 + $0x350] sm:$0xff]
                %307 = vst [vmem:[%s199 + $0x1a8] sm:$0xff] %v306
                %v308 = vld [vmem:[%s198 + $0x360] sm:$0xff]
                %309 = vst [vmem:[%s199 + $0x1b0] sm:$0xff] %v308
                %v310 = vld [vmem:[%s198 + $0x370] sm:$0xff]
                %311 = vst [vmem:[%s199 + $0x1b8] sm:$0xff] %v310
                %v312 = vld [vmem:[%s198 + $0x380] sm:$0xff]
                %313 = vst [vmem:[%s199 + $0x1c0] sm:$0xff] %v312
                %v314 = vld [vmem:[%s198 + $0x390] sm:$0xff]
                %315 = vst [vmem:[%s199 + $0x1c8] sm:$0xff] %v314
                %v316 = vld [vmem:[%s198 + $0x3a0] sm:$0xff]
                %317 = vst [vmem:[%s199 + $0x1d0] sm:$0xff] %v316
                %v318 = vld [vmem:[%s198 + $0x3b0] sm:$0xff]
                %319 = vst [vmem:[%s199 + $0x1d8] sm:$0xff] %v318
                %v320 = vld [vmem:[%s198 + $0x3c0] sm:$0xff]
                %321 = vst [vmem:[%s199 + $0x1e0] sm:$0xff] %v320
                %v322 = vld [vmem:[%s198 + $0x3d0] sm:$0xff]
                %323 = vst [vmem:[%s199 + $0x1e8] sm:$0xff] %v322
                %v324 = vld [vmem:[%s198 + $0x3e0] sm:$0xff]
                %325 = vst [vmem:[%s199 + $0x1f0] sm:$0xff] %v324
                %v326 = vld [vmem:[%s198 + $0x3f0] sm:$0xff]
                %327 = vst [vmem:[%s199 + $0x1f8] sm:$0xff] %v326
                %v328 = vld [vmem:[%s198 + $0x400] sm:$0xff]
                %329 = vst [vmem:[%s199 + $0x200] sm:$0xff] %v328
                %v330 = vld [vmem:[%s198 + $0x410] sm:$0xff]
                %331 = vst [vmem:[%s199 + $0x208] sm:$0xff] %v330
                %v332 = vld [vmem:[%s198 + $0x420] sm:$0xff]
                %333 = vst [vmem:[%s199 + $0x210] sm:$0xff] %v332
                %v334 = vld [vmem:[%s198 + $0x430] sm:$0xff]
                %335 = vst [vmem:[%s199 + $0x218] sm:$0xff] %v334
                %v336 = vld [vmem:[%s198 + $0x440] sm:$0xff]
                %337 = vst [vmem:[%s199 + $0x220] sm:$0xff] %v336
                %v338 = vld [vmem:[%s198 + $0x450] sm:$0xff]
                %339 = vst [vmem:[%s199 + $0x228] sm:$0xff] %v338
                %v340 = vld [vmem:[%s198 + $0x460] sm:$0xff]
                %341 = vst [vmem:[%s199 + $0x230] sm:$0xff] %v340
                %v342 = vld [vmem:[%s198 + $0x470] sm:$0xff]
                %343 = vst [vmem:[%s199 + $0x238] sm:$0xff] %v342
                %v344 = vld [vmem:[%s198 + $0x480] sm:$0xff]
                %345 = vst [vmem:[%s199 + $0x240] sm:$0xff] %v344
                %v346 = vld [vmem:[%s198 + $0x490] sm:$0xff]
                %347 = vst [vmem:[%s199 + $0x248] sm:$0xff] %v346
                %v348 = vld [vmem:[%s198 + $0x4a0] sm:$0xff]
                %349 = vst [vmem:[%s199 + $0x250] sm:$0xff] %v348
                %v350 = vld [vmem:[%s198 + $0x4b0] sm:$0xff]
                %351 = vst [vmem:[%s199 + $0x258] sm:$0xff] %v350
                %v352 = vld [vmem:[%s198 + $0x4c0] sm:$0xff]
                %353 = vst [vmem:[%s199 + $0x260] sm:$0xff] %v352
                %v354 = vld [vmem:[%s198 + $0x4d0] sm:$0xff]
                %355 = vst [vmem:[%s199 + $0x268] sm:$0xff] %v354
                %v356 = vld [vmem:[%s198 + $0x4e0] sm:$0xff]
                %357 = vst [vmem:[%s199 + $0x270] sm:$0xff] %v356
                %v358 = vld [vmem:[%s198 + $0x4f0] sm:$0xff]
                %359 = vst [vmem:[%s199 + $0x278] sm:$0xff] %v358
              $region41: #{_layer4_forward_impl.1} parent=35 // loop_footer
                %s197 = sadd.s32 1, %s193
              $region42: #{_layer4_forward_impl.1} parent=35 // loop_footer_branch
                %192 = sbr.rel target = $region38
              $region43: #{_layer4_forward_impl.1} parent=35 // loop_exit
                _
            $region36: #{_layer4_forward_impl.1} parent=27 // pred_fallthru
              _
          $region28: #{_layer4_forward_impl.1} parent=23 // pred_fallthru
            _
          %532 = vnop
        $region24: #{_layer4_forward_impl.1} parent=19 // pred_fallthru
          _
        // Predicated region
        $region59: #{_layer4_forward_impl.1} parent=19 // pred_check
          %p533 = pneg %p94
        $region60: #{_layer4_forward_impl.1} parent=19 // pred_check_branch
          %535 = sbr.rel (%p533) target = $region62
        $region61: #{_layer4_forward_impl.1} parent=19 // pred_region
          %p536 = scmp.lt.s32.totalorder %s20, 1
          %s537 = scalar_select %p536, %s20, 1
          %s538 = scalar_lea.vmem %s2, %s537
        $region62: #{_layer4_forward_impl.1} parent=19 // pred_fallthru
          _
        // Predicated region
        $region63: #{_layer4_forward_impl.1} parent=19 // pred_check
          %p539 = pneg %p120
        $region64: #{_layer4_forward_impl.1} parent=19 // pred_check_branch
          %541 = sbr.rel (%p539) target = $region66
        $region65: #{_layer4_forward_impl.1} parent=19 // pred_region
          %p542 = scmp.lt.s32.totalorder %s20, 1
          %s543 = scalar_select %p542, %s20, 1
          %s544 = scalar_lea.vmem %s3, %s543
        $region66: #{_layer4_forward_impl.1} parent=19 // pred_fallthru
          _
      $region20: #{_layer4_forward_impl.1} parent=5 // pred_fallthru
        _
      %p545 = scmp.le.s32.totalorder 1, %s13
      %p546 = scmp.lt.s32.totalorder %s13, 11
      %p547 = pnand %p545, %p546
      %p548 = pneg %p547
      // Predicated region
      $region67: #{_layer4_forward_impl.1} parent=5 // pred_check
        _
      $region68: #{_layer4_forward_impl.1} parent=5 // pred_check_branch
        %550 = sbr.rel (%p547) target = $region70
      $region69: #{_layer4_forward_impl.1} parent=5 // pred_region
        %s551 = ssub.s32 %s13, 1
        %s552 = sand.u32 %s61, 1
        %s553 = sand.u32 %s61, 1
        %s554 = smul.addr %s553, 640
        %s555 = scalar_lea.vmem [#allocation3], %s554
        // Predicated region
        $region71: #{_layer4_forward_impl.1} parent=69 // pred_check
          %p556 = pneg %p74
        $region72: #{_layer4_forward_impl.1} parent=69 // pred_check_branch
          %558 = sbr.rel (%p556) target = $region74
        $region73: #{_layer4_forward_impl.1} parent=69 // pred_region
          _
        $region74: #{_layer4_forward_impl.1} parent=69 // pred_fallthru
          _
        %p559 = pneg %p46
        %p560 = pneg %p43
        %s561 = sand.u32 %s61, 1
        %s562 = sand.u32 %s61, 1
        %s563 = smul.addr %s562, 640
        %s564 = scalar_lea.vmem [#allocation3], %s563
        %p565 = pneg %p74
        %p566 = pneg %p71
        %p567 = scmp.lt.s32.totalorder %s22, 1
        %s568 = scalar_select %p567, %s22, 1
        %s569 = scalar_lea.vmem %s2, %s568
        %p570 = pneg %p100
        %p571 = pneg %p97
        %p572 = scmp.lt.s32.totalorder %s22, 1
        %s573 = scalar_select %p572, %s22, 1
        %s574 = scalar_lea.vmem %s3, %s573
        %p575 = pneg %p126
        %p576 = pneg %p123
        %p577 = pneg %p152
        %p578 = pneg %p149
        %s579 = sand.u32 %s139, 1
        %s580 = scalar_lea.sflag [#allocation5], %s579
        %s581 = sand.u32 %s139, 1
        %s582 = smul.addr %s581, 128
        %s583 = scalar_lea.vmem [#allocation4], %s582
        %p584 = scmp.lt.s32.totalorder %s22, 1
        %s585 = scalar_select %p584, %s22, 1
        %s586 = scalar_lea.vmem %s2, %s585
        %p587 = scmp.lt.s32.totalorder %s22, 1
        %s588 = scalar_select %p587, %s22, 1
        %s589 = scalar_lea.vmem %s3, %s588
        %p590 = scmp.eq.s32.totalorder %s23, 0
        // Predicated region
        $region75: #{_layer4_forward_impl.1} parent=69 // pred_check
          %p591 = pneg %p590
        $region76: #{_layer4_forward_impl.1} parent=69 // pred_check_branch
          %593 = sbr.rel (%p591) target = $region78
        $region77: #{_layer4_forward_impl.1} parent=69 // pred_region
          %594 = vst [vmem:[#allocation2] sm:$0xff] 0.0
          %595 = vst [vmem:[#allocation2 + $0x8] sm:$0xff] 0.0
          %596 = vst [vmem:[#allocation2 + $0x10] sm:$0xff] 0.0
          %597 = vst [vmem:[#allocation2 + $0x18] sm:$0xff] 0.0
          %598 = vst [vmem:[#allocation2 + $0x20] sm:$0xff] 0.0
          %599 = vst [vmem:[#allocation2 + $0x28] sm:$0xff] 0.0
          %600 = vst [vmem:[#allocation2 + $0x30] sm:$0xff] 0.0
          %601 = vst [vmem:[#allocation2 + $0x38] sm:$0xff] 0.0
          %602 = vst [vmem:[#allocation2 + $0x40] sm:$0xff] 0.0
          %603 = vst [vmem:[#allocation2 + $0x48] sm:$0xff] 0.0
          %604 = vst [vmem:[#allocation2 + $0x50] sm:$0xff] 0.0
          %605 = vst [vmem:[#allocation2 + $0x58] sm:$0xff] 0.0
          %606 = vst [vmem:[#allocation2 + $0x60] sm:$0xff] 0.0
          %607 = vst [vmem:[#allocation2 + $0x68] sm:$0xff] 0.0
          %608 = vst [vmem:[#allocation2 + $0x70] sm:$0xff] 0.0
          %609 = vst [vmem:[#allocation2 + $0x78] sm:$0xff] 0.0
        $region78: #{_layer4_forward_impl.1} parent=69 // pred_fallthru
          _
        %v610 = vld [vmem:[#allocation2] sm:$0xff]
        %v611 = vld [vmem:[#allocation2 + $0x8] sm:$0xff]
        %v612 = vld [vmem:[#allocation2 + $0x10] sm:$0xff]
        %v613 = vld [vmem:[#allocation2 + $0x18] sm:$0xff]
        %v614 = vld [vmem:[#allocation2 + $0x20] sm:$0xff]
        %v615 = vld [vmem:[#allocation2 + $0x28] sm:$0xff]
        %v616 = vld [vmem:[#allocation2 + $0x30] sm:$0xff]
        %v617 = vld [vmem:[#allocation2 + $0x38] sm:$0xff]
        %v618 = vld [vmem:[#allocation2 + $0x40] sm:$0xff]
        %v619 = vld [vmem:[#allocation2 + $0x48] sm:$0xff]
        %v620 = vld [vmem:[#allocation2 + $0x50] sm:$0xff]
        %v621 = vld [vmem:[#allocation2 + $0x58] sm:$0xff]
        %v622 = vld [vmem:[#allocation2 + $0x60] sm:$0xff]
        %v623 = vld [vmem:[#allocation2 + $0x68] sm:$0xff]
        %v624 = vld [vmem:[#allocation2 + $0x70] sm:$0xff]
        %v625 = vld [vmem:[#allocation2 + $0x78] sm:$0xff]
        %s626 = smul.u32 %s23, 16
        %s627 = scalar_lea.vmem %s0, %s626
        %v628 = vld [vmem:[%s627] sm:$0xff]
        %v629 = vld [vmem:[%s627 + $0x10] sm:$0xff]
        %v630 = vld [vmem:[%s627 + $0x20] sm:$0xff]
        %v631 = vld [vmem:[%s627 + $0x30] sm:$0xff]
        %v632 = vld [vmem:[%s627 + $0x40] sm:$0xff]
        %v633 = vld [vmem:[%s627 + $0x50] sm:$0xff]
        %v634 = vld [vmem:[%s627 + $0x60] sm:$0xff]
        %v635 = vld [vmem:[%s627 + $0x70] sm:$0xff]
        %v636 = vld [vmem:[%s627 + $0xc0] sm:$0xff]
        %v637 = vld [vmem:[%s627 + $0xd0] sm:$0xff]
        %v638 = vld [vmem:[%s627 + $0xe0] sm:$0xff]
        %v639 = vld [vmem:[%s627 + $0xf0] sm:$0xff]
        %v640 = vld [vmem:[%s627 + $0x100] sm:$0xff]
        %v641 = vld [vmem:[%s627 + $0x110] sm:$0xff]
        %v642 = vld [vmem:[%s627 + $0x120] sm:$0xff]
        %v643 = vld [vmem:[%s627 + $0x130] sm:$0xff]
        %v644 = vld [vmem:[%s555] sm:$0xff]
        %v645 = vld [vmem:[%s555 + $0x8] sm:$0xff]
        %v646 = vld [vmem:[%s555 + $0x10] sm:$0xff]
        %v647 = vld [vmem:[%s555 + $0x18] sm:$0xff]
        %v648 = vld [vmem:[%s555 + $0x20] sm:$0xff]
        %v649 = vld [vmem:[%s555 + $0x28] sm:$0xff]
        %v650 = vld [vmem:[%s555 + $0x30] sm:$0xff]
        %v651 = vld [vmem:[%s555 + $0x38] sm:$0xff]
        %v652 = vld [vmem:[%s555 + $0x40] sm:$0xff]
        %v653 = vld [vmem:[%s555 + $0x48] sm:$0xff]
        %v654 = vld [vmem:[%s555 + $0x50] sm:$0xff]
        %v655 = vld [vmem:[%s555 + $0x58] sm:$0xff]
        %v656 = vld [vmem:[%s555 + $0x60] sm:$0xff]
        %v657 = vld [vmem:[%s555 + $0x68] sm:$0xff]
        %v658 = vld [vmem:[%s555 + $0x70] sm:$0xff]
        %v659 = vld [vmem:[%s555 + $0x78] sm:$0xff]
        %660 = vmatprep.subr.mxu0 0.0
        %661 = vmatpush1.msra.mxu0 %v644
        %662 = vmatprep.subr.mxu0 0.0
        %663 = vmatpush1.msra.mxu0 %v645
        %664 = vmatprep.subr.mxu0 0.0
        %665 = vmatpush1.msra.mxu0 %v646
        %666 = vmatprep.subr.mxu0 0.0
        %667 = vmatpush1.msra.mxu0 %v647
        %668 = vmatprep.subr.mxu0 0.0
        %669 = vmatpush1.msra.mxu0 %v648
        %670 = vmatprep.subr.mxu0 0.0
        %671 = vmatpush1.msra.mxu0 %v649
        %672 = vmatprep.subr.mxu0 0.0
        %673 = vmatpush1.msra.mxu0 %v650
        %674 = vmatprep.subr.mxu0 0.0
        %675 = vmatpush1.msra.mxu0 %v651
        %676 = vmatprep.subr.mxu0 0.0
        %677 = vmatpush1.msra.mxu0 %v652
        %678 = vmatprep.subr.mxu0 0.0
        %679 = vmatpush1.msra.mxu0 %v653
        %680 = vmatprep.subr.mxu0 0.0
        %681 = vmatpush1.msra.mxu0 %v654
        %682 = vmatprep.subr.mxu0 0.0
        %683 = vmatpush1.msra.mxu0 %v655
        %684 = vmatprep.subr.mxu0 0.0
        %685 = vmatpush1.msra.mxu0 %v656
        %686 = vmatprep.subr.mxu0 0.0
        %687 = vmatpush1.msra.mxu0 %v657
        %688 = vmatprep.subr.mxu0 0.0
        %689 = vmatpush1.msra.mxu0 %v658
        %690 = vmatprep.subr.mxu0 0.0
        %691 = vmatpush1.msra.mxu0 %v659
        %692 = vmatprep.subr.mxu0 0.0
        %693 = vmatpush1.msra.mxu0 0.0
        %694 = vmatprep.subr.mxu0 0.0
        %695 = vmatpush1.msra.mxu0 0.0
        %696 = vmatprep.subr.mxu0 0.0
        %697 = vmatpush1.msra.mxu0 0.0
        %698 = vmatprep.subr.mxu0 0.0
        %699 = vmatpush1.msra.mxu0 0.0
        %700 = vmatprep.subr.mxu0 0.0
        %701 = vmatpush1.msra.mxu0 0.0
        %702 = vmatprep.subr.mxu0 0.0
        %703 = vmatpush1.msra.mxu0 0.0
        %704 = vmatprep.subr.mxu0 0.0
        %705 = vmatpush1.msra.mxu0 0.0
        %706 = vmatprep.subr.mxu0 0.0
        %707 = vmatpush1.msra.mxu0 0.0
        %708 = vmatprep.subr.mxu0 0.0
        %709 = vmatpush1.msra.mxu0 0.0
        %710 = vmatprep.subr.mxu0 0.0
        %711 = vmatpush1.msra.mxu0 0.0
        %712 = vmatprep.subr.mxu0 0.0
        %713 = vmatpush1.msra.mxu0 0.0
        %714 = vmatprep.subr.mxu0 0.0
        %715 = vmatpush1.msra.mxu0 0.0
        %716 = vmatprep.subr.mxu0 0.0
        %717 = vmatpush1.msra.mxu0 0.0
        %718 = vmatprep.subr.mxu0 0.0
        %719 = vmatpush1.msra.mxu0 0.0
        %720 = vmatprep.subr.mxu0 0.0
        %721 = vmatpush1.msra.mxu0 0.0
        %722 = vmatprep.subr.mxu0 0.0
        %723 = vmatpush1.msra.mxu0 0.0
        %724 = vmatprep.mubr.f32.mxu0 0.0
        %725 = vmatmul.mubr.f32.gmra.mrb[0].mxu0 %v628
        %v726 = vpop.f32.mrb[0].mxu0
        %v727 = vadd.f32 0.0, %v726
        %v728 = vpop.f32.mrb[0].mxu0
        %729 = vmatprep.mubr.f32.mxu0 0.0
        %730 = vmatmul.mubr.f32.gmra.mrb[0].mxu0 %v629
        %v731 = vpop.f32.mrb[0].mxu0
        %v732 = vadd.f32 0.0, %v731
        %v733 = vpop.f32.mrb[0].mxu0
        %734 = vmatprep.mubr.f32.mxu0 0.0
        %735 = vmatmul.mubr.f32.gmra.mrb[0].mxu0 %v630
        %v736 = vpop.f32.mrb[0].mxu0
        %v737 = vadd.f32 0.0, %v736
        %v738 = vpop.f32.mrb[0].mxu0
        %739 = vmatprep.mubr.f32.mxu0 0.0
        %740 = vmatmul.mubr.f32.gmra.mrb[0].mxu0 %v631
        %v741 = vpop.f32.mrb[0].mxu0
        %v742 = vadd.f32 0.0, %v741
        %v743 = vpop.f32.mrb[0].mxu0
        %744 = vmatprep.mubr.f32.mxu0 0.0
        %745 = vmatmul.mubr.f32.gmra.mrb[0].mxu0 %v632
        %v746 = vpop.f32.mrb[0].mxu0
        %v747 = vadd.f32 0.0, %v746
        %v748 = vpop.f32.mrb[0].mxu0
        %749 = vmatprep.mubr.f32.mxu0 0.0
        %750 = vmatmul.mubr.f32.gmra.mrb[0].mxu0 %v633
        %v751 = vpop.f32.mrb[0].mxu0
        %v752 = vadd.f32 0.0, %v751
        %v753 = vpop.f32.mrb[0].mxu0
        %754 = vmatprep.mubr.f32.mxu0 0.0
        %755 = vmatmul.mubr.f32.gmra.mrb[0].mxu0 %v634
        %v756 = vpop.f32.mrb[0].mxu0
        %v757 = vadd.f32 0.0, %v756
        %v758 = vpop.f32.mrb[0].mxu0
        %759 = vmatprep.mubr.f32.mxu0 0.0
        %760 = vmatmul.mubr.f32.gmra.mrb[0].mxu0 %v635
        %v761 = vpop.f32.mrb[0].mxu0
        %v762 = vadd.f32 0.0, %v761
        %v763 = vpop.f32.mrb[0].mxu0
        %764 = vmatprep.mubr.f32.mxu0 0.0
        %765 = vmatmul.mubr.f32.gmra.mrb[0].mxu0 %v636
        %v766 = vpop.f32.mrb[0].mxu0
        %v767 = vadd.f32 0.0, %v766
        %v768 = vpop.f32.mrb[0].mxu0
        %769 = vmatprep.mubr.f32.mxu0 0.0
        %770 = vmatmul.mubr.f32.gmra.mrb[0].mxu0 %v637
        %v771 = vpop.f32.mrb[0].mxu0
        %v772 = vadd.f32 0.0, %v771
        %v773 = vpop.f32.mrb[0].mxu0
        %774 = vmatprep.mubr.f32.mxu0 0.0
        %775 = vmatmul.mubr.f32.gmra.mrb[0].mxu0 %v638
        %v776 = vpop.f32.mrb[0].mxu0
        %v777 = vadd.f32 0.0, %v776
        %v778 = vpop.f32.mrb[0].mxu0
        %779 = vmatprep.mubr.f32.mxu0 0.0
        %780 = vmatmul.mubr.f32.gmra.mrb[0].mxu0 %v639
        %v781 = vpop.f32.mrb[0].mxu0
        %v782 = vadd.f32 0.0, %v781
        %v783 = vpop.f32.mrb[0].mxu0
        %784 = vmatprep.mubr.f32.mxu0 0.0
        %785 = vmatmul.mubr.f32.gmra.mrb[0].mxu0 %v640
        %v786 = vpop.f32.mrb[0].mxu0
        %v787 = vadd.f32 0.0, %v786
        %v788 = vpop.f32.mrb[0].mxu0
        %789 = vmatprep.mubr.f32.mxu0 0.0
        %790 = vmatmul.mubr.f32.gmra.mrb[0].mxu0 %v641
        %v791 = vpop.f32.mrb[0].mxu0
        %v792 = vadd.f32 0.0, %v791
        %v793 = vpop.f32.mrb[0].mxu0
        %794 = vmatprep.mubr.f32.mxu0 0.0
        %795 = vmatmul.mubr.f32.gmra.mrb[0].mxu0 %v642
        %v796 = vpop.f32.mrb[0].mxu0
        %v797 = vadd.f32 0.0, %v796
        %v798 = vpop.f32.mrb[0].mxu0
        %799 = vmatprep.mubr.f32.mxu0 0.0
        %800 = vmatmul.mubr.f32.gmra.mrb[0].mxu0 %v643
        %v801 = vpop.f32.mrb[0].mxu0
        %v802 = vadd.f32 0.0, %v801
        %v803 = vpop.f32.mrb[0].mxu0
        %804 = vdwg.mxu0
        %v805 = vadd.f32 %v610, %v727
        %v806 = vadd.f32 %v611, %v732
        %v807 = vadd.f32 %v612, %v737
        %v808 = vadd.f32 %v613, %v742
        %v809 = vadd.f32 %v614, %v747
        %v810 = vadd.f32 %v615, %v752
        %v811 = vadd.f32 %v616, %v757
        %v812 = vadd.f32 %v617, %v762
        %v813 = vadd.f32 %v618, %v767
        %v814 = vadd.f32 %v619, %v772
        %v815 = vadd.f32 %v620, %v777
        %v816 = vadd.f32 %v621, %v782
        %v817 = vadd.f32 %v622, %v787
        %v818 = vadd.f32 %v623, %v792
        %v819 = vadd.f32 %v624, %v797
        %v820 = vadd.f32 %v625, %v802
        %v821 = vld [vmem:[%s627 + $0x1] sm:$0xff]
        %v822 = vld [vmem:[%s627 + $0x11] sm:$0xff]
        %v823 = vld [vmem:[%s627 + $0x21] sm:$0xff]
        %v824 = vld [vmem:[%s627 + $0x31] sm:$0xff]
        %v825 = vld [vmem:[%s627 + $0x41] sm:$0xff]
        %v826 = vld [vmem:[%s627 + $0x51] sm:$0xff]
        %v827 = vld [vmem:[%s627 + $0x61] sm:$0xff]
        %v828 = vld [vmem:[%s627 + $0x71] sm:$0xff]
        %v829 = vld [vmem:[%s627 + $0xc1] sm:$0xff]
        %v830 = vld [vmem:[%s627 + $0xd1] sm:$0xff]
        %v831 = vld [vmem:[%s627 + $0xe1] sm:$0xff]
        %v832 = vld [vmem:[%s627 + $0xf1] sm:$0xff]
        %v833 = vld [vmem:[%s627 + $0x101] sm:$0xff]
        %v834 = vld [vmem:[%s627 + $0x111] sm:$0xff]
        %v835 = vld [vmem:[%s627 + $0x121] sm:$0xff]
        %v836 = vld [vmem:[%s627 + $0x131] sm:$0xff]
        %v837 = vld [vmem:[%s555 + $0x80] sm:$0xff]
        %v838 = vld [vmem:[%s555 + $0x88] sm:$0xff]
        %v839 = vld [vmem:[%s555 + $0x90] sm:$0xff]
        %v840 = vld [vmem:[%s555 + $0x98] sm:$0xff]
        %v841 = vld [vmem:[%s555 + $0xa0] sm:$0xff]
        %v842 = vld [vmem:[%s555 + $0xa8] sm:$0xff]
        %v843 = vld [vmem:[%s555 + $0xb0] sm:$0xff]
        %v844 = vld [vmem:[%s555 + $0xb8] sm:$0xff]
        %v845 = vld [vmem:[%s555 + $0xc0] sm:$0xff]
        %v846 = vld [vmem:[%s555 + $0xc8] sm:$0xff]
        %v847 = vld [vmem:[%s555 + $0xd0] sm:$0xff]
        %v848 = vld [vmem:[%s555 + $0xd8] sm:$0xff]
        %v849 = vld [vmem:[%s555 + $0xe0] sm:$0xff]
        %v850 = vld [vmem:[%s555 + $0xe8] sm:$0xff]
        %v851 = vld [vmem:[%s555 + $0xf0] sm:$0xff]
        %v852 = vld [vmem:[%s555 + $0xf8] sm:$0xff]
        %853 = vmatprep.subr.mxu0 0.0
        %854 = vmatpush1.msra.mxu0 %v837
        %855 = vmatprep.subr.mxu0 0.0
        %856 = vmatpush1.msra.mxu0 %v838
        %857 = vmatprep.subr.mxu0 0.0
        %858 = vmatpush1.msra.mxu0 %v839
        %859 = vmatprep.subr.mxu0 0.0
        %860 = vmatpush1.msra.mxu0 %v840
        %861 = vmatprep.subr.mxu0 0.0
        %862 = vmatpush1.msra.mxu0 %v841
        %863 = vmatprep.subr.mxu0 0.0
        %864 = vmatpush1.msra.mxu0 %v842
        %865 = vmatprep.subr.mxu0 0.0
        %866 = vmatpush1.msra.mxu0 %v843
        %867 = vmatprep.subr.mxu0 0.0
        %868 = vmatpush1.msra.mxu0 %v844
        %869 = vmatprep.subr.mxu0 0.0
        %870 = vmatpush1.msra.mxu0 %v845
        %871 = vmatprep.subr.mxu0 0.0
        %872 = vmatpush1.msra.mxu0 %v846
        %873 = vmatprep.subr.mxu0 0.0
        %874 = vmatpush1.msra.mxu0 %v847
        %875 = vmatprep.subr.mxu0 0.0
        %876 = vmatpush1.msra.mxu0 %v848
        %877 = vmatprep.subr.mxu0 0.0
        %878 = vmatpush1.msra.mxu0 %v849
        %879 = vmatprep.subr.mxu0 0.0
        %880 = vmatpush1.msra.mxu0 %v850
        %881 = vmatprep.subr.mxu0 0.0
        %882 = vmatpush1.msra.mxu0 %v851
        %883 = vmatprep.subr.mxu0 0.0
        %884 = vmatpush1.msra.mxu0 %v852
        %885 = vmatprep.subr.mxu0 0.0
        %886 = vmatpush1.msra.mxu0 0.0
        %887 = vmatprep.subr.mxu0 0.0
        %888 = vmatpush1.msra.mxu0 0.0
        %889 = vmatprep.subr.mxu0 0.0
        %890 = vmatpush1.msra.mxu0 0.0
        %891 = vmatprep.subr.mxu0 0.0
        %892 = vmatpush1.msra.mxu0 0.0
        %893 = vmatprep.subr.mxu0 0.0
        %894 = vmatpush1.msra.mxu0 0.0
        %895 = vmatprep.subr.mxu0 0.0
        %896 = vmatpush1.msra.mxu0 0.0
        %897 = vmatprep.subr.mxu0 0.0
        %898 = vmatpush1.msra.mxu0 0.0
        %899 = vmatprep.subr.mxu0 0.0
        %900 = vmatpush1.msra.mxu0 0.0
        %901 = vmatprep.subr.mxu0 0.0
        %902 = vmatpush1.msra.mxu0 0.0
        %903 = vmatprep.subr.mxu0 0.0
        %904 = vmatpush1.msra.mxu0 0.0
        %905 = vmatprep.subr.mxu0 0.0
        %906 = vmatpush1.msra.mxu0 0.0
        %907 = vmatprep.subr.mxu0 0.0
        %908 = vmatpush1.msra.mxu0 0.0
        %909 = vmatprep.subr.mxu0 0.0
        %910 = vmatpush1.msra.mxu0 0.0
        %911 = vmatprep.subr.mxu0 0.0
        %912 = vmatpush1.msra.mxu0 0.0
        %913 = vmatprep.subr.mxu0 0.0
        %914 = vmatpush1.msra.mxu0 0.0
        %915 = vmatprep.subr.mxu0 0.0
        %916 = vmatpush1.msra.mxu0 0.0
        %917 = vmatprep.mubr.f32.mxu0 0.0
        %918 = vmatmul.mubr.f32.gmra.mrb[0].mxu0 %v821
        %v919 = vpop.f32.mrb[0].mxu0
        %v920 = vadd.f32 0.0, %v919
        %v921 = vpop.f32.mrb[0].mxu0
        %922 = vmatprep.mubr.f32.mxu0 0.0
        %923 = vmatmul.mubr.f32.gmra.mrb[0].mxu0 %v822
        %v924 = vpop.f32.mrb[0].mxu0
        %v925 = vadd.f32 0.0, %v924
        %v926 = vpop.f32.mrb[0].mxu0
        %927 = vmatprep.mubr.f32.mxu0 0.0
        %928 = vmatmul.mubr.f32.gmra.mrb[0].mxu0 %v823
        %v929 = vpop.f32.mrb[0].mxu0
        %v930 = vadd.f32 0.0, %v929
        %v931 = vpop.f32.mrb[0].mxu0
        %932 = vmatprep.mubr.f32.mxu0 0.0
        %933 = vmatmul.mubr.f32.gmra.mrb[0].mxu0 %v824
        %v934 = vpop.f32.mrb[0].mxu0
        %v935 = vadd.f32 0.0, %v934
        %v936 = vpop.f32.mrb[0].mxu0
        %937 = vmatprep.mubr.f32.mxu0 0.0
        %938 = vmatmul.mubr.f32.gmra.mrb[0].mxu0 %v825
        %v939 = vpop.f32.mrb[0].mxu0
        %v940 = vadd.f32 0.0, %v939
        %v941 = vpop.f32.mrb[0].mxu0
        %942 = vmatprep.mubr.f32.mxu0 0.0
        %943 = vmatmul.mubr.f32.gmra.mrb[0].mxu0 %v826
        %v944 = vpop.f32.mrb[0].mxu0
        %v945 = vadd.f32 0.0, %v944
        %v946 = vpop.f32.mrb[0].mxu0
        %947 = vmatprep.mubr.f32.mxu0 0.0
        %948 = vmatmul.mubr.f32.gmra.mrb[0].mxu0 %v827
        %v949 = vpop.f32.mrb[0].mxu0
        %v950 = vadd.f32 0.0, %v949
        %v951 = vpop.f32.mrb[0].mxu0
        %952 = vmatprep.mubr.f32.mxu0 0.0
        %953 = vmatmul.mubr.f32.gmra.mrb[0].mxu0 %v828
        %v954 = vpop.f32.mrb[0].mxu0
        %v955 = vadd.f32 0.0, %v954
        %v956 = vpop.f32.mrb[0].mxu0
        %957 = vmatprep.mubr.f32.mxu0 0.0
        %958 = vmatmul.mubr.f32.gmra.mrb[0].mxu0 %v829
        %v959 = vpop.f32.mrb[0].mxu0
        %v960 = vadd.f32 0.0, %v959
        %v961 = vpop.f32.mrb[0].mxu0
        %962 = vmatprep.mubr.f32.mxu0 0.0
        %963 = vmatmul.mubr.f32.gmra.mrb[0].mxu0 %v830
        %v964 = vpop.f32.mrb[0].mxu0
        %v965 = vadd.f32 0.0, %v964
        %v966 = vpop.f32.mrb[0].mxu0
        %967 = vmatprep.mubr.f32.mxu0 0.0
        %968 = vmatmul.mubr.f32.gmra.mrb[0].mxu0 %v831
        %v969 = vpop.f32.mrb[0].mxu0
        %v970 = vadd.f32 0.0, %v969
        %v971 = vpop.f32.mrb[0].mxu0
        %972 = vmatprep.mubr.f32.mxu0 0.0
        %973 = vmatmul.mubr.f32.gmra.mrb[0].mxu0 %v832
        %v974 = vpop.f32.mrb[0].mxu0
        %v975 = vadd.f32 0.0, %v974
        %v976 = vpop.f32.mrb[0].mxu0
        %977 = vmatprep.mubr.f32.mxu0 0.0
        %978 = vmatmul.mubr.f32.gmra.mrb[0].mxu0 %v833
        %v979 = vpop.f32.mrb[0].mxu0
        %v980 = vadd.f32 0.0, %v979
        %v981 = vpop.f32.mrb[0].mxu0
        %982 = vmatprep.mubr.f32.mxu0 0.0
        %983 = vmatmul.mubr.f32.gmra.mrb[0].mxu0 %v834
        %v984 = vpop.f32.mrb[0].mxu0
        %v985 = vadd.f32 0.0, %v984
        %v986 = vpop.f32.mrb[0].mxu0
        %987 = vmatprep.mubr.f32.mxu0 0.0
        %988 = vmatmul.mubr.f32.gmra.mrb[0].mxu0 %v835
        %v989 = vpop.f32.mrb[0].mxu0
        %v990 = vadd.f32 0.0, %v989
        %v991 = vpop.f32.mrb[0].mxu0
        %992 = vmatprep.mubr.f32.mxu0 0.0
        %993 = vmatmul.mubr.f32.gmra.mrb[0].mxu0 %v836
        %v994 = vpop.f32.mrb[0].mxu0
        %v995 = vadd.f32 0.0, %v994
        %v996 = vpop.f32.mrb[0].mxu0
        %997 = vdwg.mxu0
        %v998 = vadd.f32 %v805, %v920
        %v999 = vadd.f32 %v806, %v925
        %v1000 = vadd.f32 %v807, %v930
        %v1001 = vadd.f32 %v808, %v935
        %v1002 = vadd.f32 %v809, %v940
        %v1003 = vadd.f32 %v810, %v945
        %v1004 = vadd.f32 %v811, %v950
        %v1005 = vadd.f32 %v812, %v955
        %v1006 = vadd.f32 %v813, %v960
        %v1007 = vadd.f32 %v814, %v965
        %v1008 = vadd.f32 %v815, %v970
        %v1009 = vadd.f32 %v816, %v975
        %v1010 = vadd.f32 %v817, %v980
        %v1011 = vadd.f32 %v818, %v985
        %v1012 = vadd.f32 %v819, %v990
        %v1013 = vadd.f32 %v820, %v995
        %v1014 = vld [vmem:[%s627 + $0x2] sm:$0xff]
        %v1015 = vld [vmem:[%s627 + $0x12] sm:$0xff]
        %v1016 = vld [vmem:[%s627 + $0x22] sm:$0xff]
        %v1017 = vld [vmem:[%s627 + $0x32] sm:$0xff]
        %v1018 = vld [vmem:[%s627 + $0x42] sm:$0xff]
        %v1019 = vld [vmem:[%s627 + $0x52] sm:$0xff]
        %v1020 = vld [vmem:[%s627 + $0x62] sm:$0xff]
        %v1021 = vld [vmem:[%s627 + $0x72] sm:$0xff]
        %v1022 = vld [vmem:[%s627 + $0xc2] sm:$0xff]
        %v1023 = vld [vmem:[%s627 + $0xd2] sm:$0xff]
        %v1024 = vld [vmem:[%s627 + $0xe2] sm:$0xff]
        %v1025 = vld [vmem:[%s627 + $0xf2] sm:$0xff]
        %v1026 = vld [vmem:[%s627 + $0x102] sm:$0xff]
        %v1027 = vld [vmem:[%s627 + $0x112] sm:$0xff]
        %v1028 = vld [vmem:[%s627 + $0x122] sm:$0xff]
        %v1029 = vld [vmem:[%s627 + $0x132] sm:$0xff]
        %v1030 = vld [vmem:[%s555 + $0x100] sm:$0xff]
        %v1031 = vld [vmem:[%s555 + $0x108] sm:$0xff]
        %v1032 = vld [vmem:[%s555 + $0x110] sm:$0xff]
        %v1033 = vld [vmem:[%s555 + $0x118] sm:$0xff]
        %v1034 = vld [vmem:[%s555 + $0x120] sm:$0xff]
        %v1035 = vld [vmem:[%s555 + $0x128] sm:$0xff]
        %v1036 = vld [vmem:[%s555 + $0x130] sm:$0xff]
        %v1037 = vld [vmem:[%s555 + $0x138] sm:$0xff]
        %v1038 = vld [vmem:[%s555 + $0x140] sm:$0xff]
        %v1039 = vld [vmem:[%s555 + $0x148] sm:$0xff]
        %v1040 = vld [vmem:[%s555 + $0x150] sm:$0xff]
        %v1041 = vld [vmem:[%s555 + $0x158] sm:$0xff]
        %v1042 = vld [vmem:[%s555 + $0x160] sm:$0xff]
        %v1043 = vld [vmem:[%s555 + $0x168] sm:$0xff]
        %v1044 = vld [vmem:[%s555 + $0x170] sm:$0xff]
        %v1045 = vld [vmem:[%s555 + $0x178] sm:$0xff]
        %1046 = vmatprep.subr.mxu0 0.0
        %1047 = vmatpush1.msra.mxu0 %v1030
        %1048 = vmatprep.subr.mxu0 0.0
        %1049 = vmatpush1.msra.mxu0 %v1031
        %1050 = vmatprep.subr.mxu0 0.0
        %1051 = vmatpush1.msra.mxu0 %v1032
        %1052 = vmatprep.subr.mxu0 0.0
        %1053 = vmatpush1.msra.mxu0 %v1033
        %1054 = vmatprep.subr.mxu0 0.0
        %1055 = vmatpush1.msra.mxu0 %v1034
        %1056 = vmatprep.subr.mxu0 0.0
        %1057 = vmatpush1.msra.mxu0 %v1035
        %1058 = vmatprep.subr.mxu0 0.0
        %1059 = vmatpush1.msra.mxu0 %v1036
        %1060 = vmatprep.subr.mxu0 0.0
        %1061 = vmatpush1.msra.mxu0 %v1037
        %1062 = vmatprep.subr.mxu0 0.0
        %1063 = vmatpush1.msra.mxu0 %v1038
        %1064 = vmatprep.subr.mxu0 0.0
        %1065 = vmatpush1.msra.mxu0 %v1039
        %1066 = vmatprep.subr.mxu0 0.0
        %1067 = vmatpush1.msra.mxu0 %v1040
        %1068 = vmatprep.subr.mxu0 0.0
        %1069 = vmatpush1.msra.mxu0 %v1041
        %1070 = vmatprep.subr.mxu0 0.0
        %1071 = vmatpush1.msra.mxu0 %v1042
        %1072 = vmatprep.subr.mxu0 0.0
        %1073 = vmatpush1.msra.mxu0 %v1043
        %1074 = vmatprep.subr.mxu0 0.0
        %1075 = vmatpush1.msra.mxu0 %v1044
        %1076 = vmatprep.subr.mxu0 0.0
        %1077 = vmatpush1.msra.mxu0 %v1045
        %1078 = vmatprep.subr.mxu0 0.0
        %1079 = vmatpush1.msra.mxu0 0.0
        %1080 = vmatprep.subr.mxu0 0.0
        %1081 = vmatpush1.msra.mxu0 0.0
        %1082 = vmatprep.subr.mxu0 0.0
        %1083 = vmatpush1.msra.mxu0 0.0
        %1084 = vmatprep.subr.mxu0 0.0
        %1085 = vmatpush1.msra.mxu0 0.0
        %1086 = vmatprep.subr.mxu0 0.0
        %1087 = vmatpush1.msra.mxu0 0.0
        %1088 = vmatprep.subr.mxu0 0.0
        %1089 = vmatpush1.msra.mxu0 0.0
        %1090 = vmatprep.subr.mxu0 0.0
        %1091 = vmatpush1.msra.mxu0 0.0
        %1092 = vmatprep.subr.mxu0 0.0
        %1093 = vmatpush1.msra.mxu0 0.0
        %1094 = vmatprep.subr.mxu0 0.0
        %1095 = vmatpush1.msra.mxu0 0.0
        %1096 = vmatprep.subr.mxu0 0.0
        %1097 = vmatpush1.msra.mxu0 0.0
        %1098 = vmatprep.subr.mxu0 0.0
        %1099 = vmatpush1.msra.mxu0 0.0
        %1100 = vmatprep.subr.mxu0 0.0
        %1101 = vmatpush1.msra.mxu0 0.0
        %1102 = vmatprep.subr.mxu0 0.0
        %1103 = vmatpush1.msra.mxu0 0.0
        %1104 = vmatprep.subr.mxu0 0.0
        %1105 = vmatpush1.msra.mxu0 0.0
        %1106 = vmatprep.subr.mxu0 0.0
        %1107 = vmatpush1.msra.mxu0 0.0
        %1108 = vmatprep.subr.mxu0 0.0
        %1109 = vmatpush1.msra.mxu0 0.0
        %1110 = vmatprep.mubr.f32.mxu0 0.0
        %1111 = vmatmul.mubr.f32.gmra.mrb[0].mxu0 %v1014
        %v1112 = vpop.f32.mrb[0].mxu0
        %v1113 = vadd.f32 0.0, %v1112
        %v1114 = vpop.f32.mrb[0].mxu0
        %1115 = vmatprep.mubr.f32.mxu0 0.0
        %1116 = vmatmul.mubr.f32.gmra.mrb[0].mxu0 %v1015
        %v1117 = vpop.f32.mrb[0].mxu0
        %v1118 = vadd.f32 0.0, %v1117
        %v1119 = vpop.f32.mrb[0].mxu0
        %1120 = vmatprep.mubr.f32.mxu0 0.0
        %1121 = vmatmul.mubr.f32.gmra.mrb[0].mxu0 %v1016
        %v1122 = vpop.f32.mrb[0].mxu0
        %v1123 = vadd.f32 0.0, %v1122
        %v1124 = vpop.f32.mrb[0].mxu0
        %1125 = vmatprep.mubr.f32.mxu0 0.0
        %1126 = vmatmul.mubr.f32.gmra.mrb[0].mxu0 %v1017
        %v1127 = vpop.f32.mrb[0].mxu0
        %v1128 = vadd.f32 0.0, %v1127
        %v1129 = vpop.f32.mrb[0].mxu0
        %1130 = vmatprep.mubr.f32.mxu0 0.0
        %1131 = vmatmul.mubr.f32.gmra.mrb[0].mxu0 %v1018
        %v1132 = vpop.f32.mrb[0].mxu0
        %v1133 = vadd.f32 0.0, %v1132
        %v1134 = vpop.f32.mrb[0].mxu0
        %1135 = vmatprep.mubr.f32.mxu0 0.0
        %1136 = vmatmul.mubr.f32.gmra.mrb[0].mxu0 %v1019
        %v1137 = vpop.f32.mrb[0].mxu0
        %v1138 = vadd.f32 0.0, %v1137
        %v1139 = vpop.f32.mrb[0].mxu0
        %1140 = vmatprep.mubr.f32.mxu0 0.0
        %1141 = vmatmul.mubr.f32.gmra.mrb[0].mxu0 %v1020
        %v1142 = vpop.f32.mrb[0].mxu0
        %v1143 = vadd.f32 0.0, %v1142
        %v1144 = vpop.f32.mrb[0].mxu0
        %1145 = vmatprep.mubr.f32.mxu0 0.0
        %1146 = vmatmul.mubr.f32.gmra.mrb[0].mxu0 %v1021
        %v1147 = vpop.f32.mrb[0].mxu0
        %v1148 = vadd.f32 0.0, %v1147
        %v1149 = vpop.f32.mrb[0].mxu0
        %1150 = vmatprep.mubr.f32.mxu0 0.0
        %1151 = vmatmul.mubr.f32.gmra.mrb[0].mxu0 %v1022
        %v1152 = vpop.f32.mrb[0].mxu0
        %v1153 = vadd.f32 0.0, %v1152
        %v1154 = vpop.f32.mrb[0].mxu0
        %1155 = vmatprep.mubr.f32.mxu0 0.0
        %1156 = vmatmul.mubr.f32.gmra.mrb[0].mxu0 %v1023
        %v1157 = vpop.f32.mrb[0].mxu0
        %v1158 = vadd.f32 0.0, %v1157
        %v1159 = vpop.f32.mrb[0].mxu0
        %1160 = vmatprep.mubr.f32.mxu0 0.0
        %1161 = vmatmul.mubr.f32.gmra.mrb[0].mxu0 %v1024
        %v1162 = vpop.f32.mrb[0].mxu0
        %v1163 = vadd.f32 0.0, %v1162
        %v1164 = vpop.f32.mrb[0].mxu0
        %1165 = vmatprep.mubr.f32.mxu0 0.0
        %1166 = vmatmul.mubr.f32.gmra.mrb[0].mxu0 %v1025
        %v1167 = vpop.f32.mrb[0].mxu0
        %v1168 = vadd.f32 0.0, %v1167
        %v1169 = vpop.f32.mrb[0].mxu0
        %1170 = vmatprep.mubr.f32.mxu0 0.0
        %1171 = vmatmul.mubr.f32.gmra.mrb[0].mxu0 %v1026
        %v1172 = vpop.f32.mrb[0].mxu0
        %v1173 = vadd.f32 0.0, %v1172
        %v1174 = vpop.f32.mrb[0].mxu0
        %1175 = vmatprep.mubr.f32.mxu0 0.0
        %1176 = vmatmul.mubr.f32.gmra.mrb[0].mxu0 %v1027
        %v1177 = vpop.f32.mrb[0].mxu0
        %v1178 = vadd.f32 0.0, %v1177
        %v1179 = vpop.f32.mrb[0].mxu0
        %1180 = vmatprep.mubr.f32.mxu0 0.0
        %1181 = vmatmul.mubr.f32.gmra.mrb[0].mxu0 %v1028
        %v1182 = vpop.f32.mrb[0].mxu0
        %v1183 = vadd.f32 0.0, %v1182
        %v1184 = vpop.f32.mrb[0].mxu0
        %1185 = vmatprep.mubr.f32.mxu0 0.0
        %1186 = vmatmul.mubr.f32.gmra.mrb[0].mxu0 %v1029
        %v1187 = vpop.f32.mrb[0].mxu0
        %v1188 = vadd.f32 0.0, %v1187
        %v1189 = vpop.f32.mrb[0].mxu0
        %1190 = vdwg.mxu0
        %v1191 = vadd.f32 %v998, %v1113
        %v1192 = vadd.f32 %v999, %v1118
        %v1193 = vadd.f32 %v1000, %v1123
        %v1194 = vadd.f32 %v1001, %v1128
        %v1195 = vadd.f32 %v1002, %v1133
        %v1196 = vadd.f32 %v1003, %v1138
        %v1197 = vadd.f32 %v1004, %v1143
        %v1198 = vadd.f32 %v1005, %v1148
        %v1199 = vadd.f32 %v1006, %v1153
        %v1200 = vadd.f32 %v1007, %v1158
        %v1201 = vadd.f32 %v1008, %v1163
        %v1202 = vadd.f32 %v1009, %v1168
        %v1203 = vadd.f32 %v1010, %v1173
        %v1204 = vadd.f32 %v1011, %v1178
        %v1205 = vadd.f32 %v1012, %v1183
        %v1206 = vadd.f32 %v1013, %v1188
        %v1207 = vld [vmem:[%s627 + $0x3] sm:$0xff]
        %v1208 = vld [vmem:[%s627 + $0x13] sm:$0xff]
        %v1209 = vld [vmem:[%s627 + $0x23] sm:$0xff]
        %v1210 = vld [vmem:[%s627 + $0x33] sm:$0xff]
        %v1211 = vld [vmem:[%s627 + $0x43] sm:$0xff]
        %v1212 = vld [vmem:[%s627 + $0x53] sm:$0xff]
        %v1213 = vld [vmem:[%s627 + $0x63] sm:$0xff]
        %v1214 = vld [vmem:[%s627 + $0x73] sm:$0xff]
        %v1215 = vld [vmem:[%s627 + $0xc3] sm:$0xff]
        %v1216 = vld [vmem:[%s627 + $0xd3] sm:$0xff]
        %v1217 = vld [vmem:[%s627 + $0xe3] sm:$0xff]
        %v1218 = vld [vmem:[%s627 + $0xf3] sm:$0xff]
        %v1219 = vld [vmem:[%s627 + $0x103] sm:$0xff]
        %v1220 = vld [vmem:[%s627 + $0x113] sm:$0xff]
        %v1221 = vld [vmem:[%s627 + $0x123] sm:$0xff]
        %v1222 = vld [vmem:[%s627 + $0x133] sm:$0xff]
        %v1223 = vld [vmem:[%s555 + $0x180] sm:$0xff]
        %v1224 = vld [vmem:[%s555 + $0x188] sm:$0xff]
        %v1225 = vld [vmem:[%s555 + $0x190] sm:$0xff]
        %v1226 = vld [vmem:[%s555 + $0x198] sm:$0xff]
        %v1227 = vld [vmem:[%s555 + $0x1a0] sm:$0xff]
        %v1228 = vld [vmem:[%s555 + $0x1a8] sm:$0xff]
        %v1229 = vld [vmem:[%s555 + $0x1b0] sm:$0xff]
        %v1230 = vld [vmem:[%s555 + $0x1b8] sm:$0xff]
        %v1231 = vld [vmem:[%s555 + $0x1c0] sm:$0xff]
        %v1232 = vld [vmem:[%s555 + $0x1c8] sm:$0xff]
        %v1233 = vld [vmem:[%s555 + $0x1d0] sm:$0xff]
        %v1234 = vld [vmem:[%s555 + $0x1d8] sm:$0xff]
        %v1235 = vld [vmem:[%s555 + $0x1e0] sm:$0xff]
        %v1236 = vld [vmem:[%s555 + $0x1e8] sm:$0xff]
        %v1237 = vld [vmem:[%s555 + $0x1f0] sm:$0xff]
        %v1238 = vld [vmem:[%s555 + $0x1f8] sm:$0xff]
        %1239 = vmatprep.subr.mxu0 0.0
        %1240 = vmatpush1.msra.mxu0 %v1223
        %1241 = vmatprep.subr.mxu0 0.0
        %1242 = vmatpush1.msra.mxu0 %v1224
        %1243 = vmatprep.subr.mxu0 0.0
        %1244 = vmatpush1.msra.mxu0 %v1225
        %1245 = vmatprep.subr.mxu0 0.0
        %1246 = vmatpush1.msra.mxu0 %v1226
        %1247 = vmatprep.subr.mxu0 0.0
        %1248 = vmatpush1.msra.mxu0 %v1227
        %1249 = vmatprep.subr.mxu0 0.0
        %1250 = vmatpush1.msra.mxu0 %v1228
        %1251 = vmatprep.subr.mxu0 0.0
        %1252 = vmatpush1.msra.mxu0 %v1229
        %1253 = vmatprep.subr.mxu0 0.0
        %1254 = vmatpush1.msra.mxu0 %v1230
        %1255 = vmatprep.subr.mxu0 0.0
        %1256 = vmatpush1.msra.mxu0 %v1231
        %1257 = vmatprep.subr.mxu0 0.0
        %1258 = vmatpush1.msra.mxu0 %v1232
        %1259 = vmatprep.subr.mxu0 0.0
        %1260 = vmatpush1.msra.mxu0 %v1233
        %1261 = vmatprep.subr.mxu0 0.0
        %1262 = vmatpush1.msra.mxu0 %v1234
        %1263 = vmatprep.subr.mxu0 0.0
        %1264 = vmatpush1.msra.mxu0 %v1235
        %1265 = vmatprep.subr.mxu0 0.0
        %1266 = vmatpush1.msra.mxu0 %v1236
        %1267 = vmatprep.subr.mxu0 0.0
        %1268 = vmatpush1.msra.mxu0 %v1237
        %1269 = vmatprep.subr.mxu0 0.0
        %1270 = vmatpush1.msra.mxu0 %v1238
        %1271 = vmatprep.subr.mxu0 0.0
        %1272 = vmatpush1.msra.mxu0 0.0
        %1273 = vmatprep.subr.mxu0 0.0
        %1274 = vmatpush1.msra.mxu0 0.0
        %1275 = vmatprep.subr.mxu0 0.0
        %1276 = vmatpush1.msra.mxu0 0.0
        %1277 = vmatprep.subr.mxu0 0.0
        %1278 = vmatpush1.msra.mxu0 0.0
        %1279 = vmatprep.subr.mxu0 0.0
        %1280 = vmatpush1.msra.mxu0 0.0
        %1281 = vmatprep.subr.mxu0 0.0
        %1282 = vmatpush1.msra.mxu0 0.0
        %1283 = vmatprep.subr.mxu0 0.0
        %1284 = vmatpush1.msra.mxu0 0.0
        %1285 = vmatprep.subr.mxu0 0.0
        %1286 = vmatpush1.msra.mxu0 0.0
        %1287 = vmatprep.subr.mxu0 0.0
        %1288 = vmatpush1.msra.mxu0 0.0
        %1289 = vmatprep.subr.mxu0 0.0
        %1290 = vmatpush1.msra.mxu0 0.0
        %1291 = vmatprep.subr.mxu0 0.0
        %1292 = vmatpush1.msra.mxu0 0.0
        %1293 = vmatprep.subr.mxu0 0.0
        %1294 = vmatpush1.msra.mxu0 0.0
        %1295 = vmatprep.subr.mxu0 0.0
        %1296 = vmatpush1.msra.mxu0 0.0
        %1297 = vmatprep.subr.mxu0 0.0
        %1298 = vmatpush1.msra.mxu0 0.0
        %1299 = vmatprep.subr.mxu0 0.0
        %1300 = vmatpush1.msra.mxu0 0.0
        %1301 = vmatprep.subr.mxu0 0.0
        %1302 = vmatpush1.msra.mxu0 0.0
        %1303 = vmatprep.mubr.f32.mxu0 0.0
        %1304 = vmatmul.mubr.f32.gmra.mrb[0].mxu0 %v1207
        %v1305 = vpop.f32.mrb[0].mxu0
        %v1306 = vadd.f32 0.0, %v1305
        %v1307 = vpop.f32.mrb[0].mxu0
        %1308 = vmatprep.mubr.f32.mxu0 0.0
        %1309 = vmatmul.mubr.f32.gmra.mrb[0].mxu0 %v1208
        %v1310 = vpop.f32.mrb[0].mxu0
        %v1311 = vadd.f32 0.0, %v1310
        %v1312 = vpop.f32.mrb[0].mxu0
        %1313 = vmatprep.mubr.f32.mxu0 0.0
        %1314 = vmatmul.mubr.f32.gmra.mrb[0].mxu0 %v1209
        %v1315 = vpop.f32.mrb[0].mxu0
        %v1316 = vadd.f32 0.0, %v1315
        %v1317 = vpop.f32.mrb[0].mxu0
        %1318 = vmatprep.mubr.f32.mxu0 0.0
        %1319 = vmatmul.mubr.f32.gmra.mrb[0].mxu0 %v1210
        %v1320 = vpop.f32.mrb[0].mxu0
        %v1321 = vadd.f32 0.0, %v1320
        %v1322 = vpop.f32.mrb[0].mxu0
        %1323 = vmatprep.mubr.f32.mxu0 0.0
        %1324 = vmatmul.mubr.f32.gmra.mrb[0].mxu0 %v1211
        %v1325 = vpop.f32.mrb[0].mxu0
        %v1326 = vadd.f32 0.0, %v1325
        %v1327 = vpop.f32.mrb[0].mxu0
        %1328 = vmatprep.mubr.f32.mxu0 0.0
        %1329 = vmatmul.mubr.f32.gmra.mrb[0].mxu0 %v1212
        %v1330 = vpop.f32.mrb[0].mxu0
        %v1331 = vadd.f32 0.0, %v1330
        %v1332 = vpop.f32.mrb[0].mxu0
        %1333 = vmatprep.mubr.f32.mxu0 0.0
        %1334 = vmatmul.mubr.f32.gmra.mrb[0].mxu0 %v1213
        %v1335 = vpop.f32.mrb[0].mxu0
        %v1336 = vadd.f32 0.0, %v1335
        %v1337 = vpop.f32.mrb[0].mxu0
        %1338 = vmatprep.mubr.f32.mxu0 0.0
        %1339 = vmatmul.mubr.f32.gmra.mrb[0].mxu0 %v1214
        %v1340 = vpop.f32.mrb[0].mxu0
        %v1341 = vadd.f32 0.0, %v1340
        %v1342 = vpop.f32.mrb[0].mxu0
        %1343 = vmatprep.mubr.f32.mxu0 0.0
        %1344 = vmatmul.mubr.f32.gmra.mrb[0].mxu0 %v1215
        %v1345 = vpop.f32.mrb[0].mxu0
        %v1346 = vadd.f32 0.0, %v1345
        %v1347 = vpop.f32.mrb[0].mxu0
        %1348 = vmatprep.mubr.f32.mxu0 0.0
        %1349 = vmatmul.mubr.f32.gmra.mrb[0].mxu0 %v1216
        %v1350 = vpop.f32.mrb[0].mxu0
        %v1351 = vadd.f32 0.0, %v1350
        %v1352 = vpop.f32.mrb[0].mxu0
        %1353 = vmatprep.mubr.f32.mxu0 0.0
        %1354 = vmatmul.mubr.f32.gmra.mrb[0].mxu0 %v1217
        %v1355 = vpop.f32.mrb[0].mxu0
        %v1356 = vadd.f32 0.0, %v1355
        %v1357 = vpop.f32.mrb[0].mxu0
        %1358 = vmatprep.mubr.f32.mxu0 0.0
        %1359 = vmatmul.mubr.f32.gmra.mrb[0].mxu0 %v1218
        %v1360 = vpop.f32.mrb[0].mxu0
        %v1361 = vadd.f32 0.0, %v1360
        %v1362 = vpop.f32.mrb[0].mxu0
        %1363 = vmatprep.mubr.f32.mxu0 0.0
        %1364 = vmatmul.mubr.f32.gmra.mrb[0].mxu0 %v1219
        %v1365 = vpop.f32.mrb[0].mxu0
        %v1366 = vadd.f32 0.0, %v1365
        %v1367 = vpop.f32.mrb[0].mxu0
        %1368 = vmatprep.mubr.f32.mxu0 0.0
        %1369 = vmatmul.mubr.f32.gmra.mrb[0].mxu0 %v1220
        %v1370 = vpop.f32.mrb[0].mxu0
        %v1371 = vadd.f32 0.0, %v1370
        %v1372 = vpop.f32.mrb[0].mxu0
        %1373 = vmatprep.mubr.f32.mxu0 0.0
        %1374 = vmatmul.mubr.f32.gmra.mrb[0].mxu0 %v1221
        %v1375 = vpop.f32.mrb[0].mxu0
        %v1376 = vadd.f32 0.0, %v1375
        %v1377 = vpop.f32.mrb[0].mxu0
        %1378 = vmatprep.mubr.f32.mxu0 0.0
        %1379 = vmatmul.mubr.f32.gmra.mrb[0].mxu0 %v1222
        %v1380 = vpop.f32.mrb[0].mxu0
        %v1381 = vadd.f32 0.0, %v1380
        %v1382 = vpop.f32.mrb[0].mxu0
        %1383 = vdwg.mxu0
        %v1384 = vadd.f32 %v1191, %v1306
        %v1385 = vadd.f32 %v1192, %v1311
        %v1386 = vadd.f32 %v1193, %v1316
        %v1387 = vadd.f32 %v1194, %v1321
        %v1388 = vadd.f32 %v1195, %v1326
        %v1389 = vadd.f32 %v1196, %v1331
        %v1390 = vadd.f32 %v1197, %v1336
        %v1391 = vadd.f32 %v1198, %v1341
        %v1392 = vadd.f32 %v1199, %v1346
        %v1393 = vadd.f32 %v1200, %v1351
        %v1394 = vadd.f32 %v1201, %v1356
        %v1395 = vadd.f32 %v1202, %v1361
        %v1396 = vadd.f32 %v1203, %v1366
        %v1397 = vadd.f32 %v1204, %v1371
        %v1398 = vadd.f32 %v1205, %v1376
        %v1399 = vadd.f32 %v1206, %v1381
        %v1400 = vld [vmem:[%s627 + $0x4] sm:$0xff]
        %v1401 = vld [vmem:[%s627 + $0x14] sm:$0xff]
        %v1402 = vld [vmem:[%s627 + $0x24] sm:$0xff]
        %v1403 = vld [vmem:[%s627 + $0x34] sm:$0xff]
        %v1404 = vld [vmem:[%s627 + $0x44] sm:$0xff]
        %v1405 = vld [vmem:[%s627 + $0x54] sm:$0xff]
        %v1406 = vld [vmem:[%s627 + $0x64] sm:$0xff]
        %v1407 = vld [vmem:[%s627 + $0x74] sm:$0xff]
        %v1408 = vld [vmem:[%s627 + $0xc4] sm:$0xff]
        %v1409 = vld [vmem:[%s627 + $0xd4] sm:$0xff]
        %v1410 = vld [vmem:[%s627 + $0xe4] sm:$0xff]
        %v1411 = vld [vmem:[%s627 + $0xf4] sm:$0xff]
        %v1412 = vld [vmem:[%s627 + $0x104] sm:$0xff]
        %v1413 = vld [vmem:[%s627 + $0x114] sm:$0xff]
        %v1414 = vld [vmem:[%s627 + $0x124] sm:$0xff]
        %v1415 = vld [vmem:[%s627 + $0x134] sm:$0xff]
        %v1416 = vld [vmem:[%s555 + $0x200] sm:$0xff]
        %v1417 = vld [vmem:[%s555 + $0x208] sm:$0xff]
        %v1418 = vld [vmem:[%s555 + $0x210] sm:$0xff]
        %v1419 = vld [vmem:[%s555 + $0x218] sm:$0xff]
        %v1420 = vld [vmem:[%s555 + $0x220] sm:$0xff]
        %v1421 = vld [vmem:[%s555 + $0x228] sm:$0xff]
        %v1422 = vld [vmem:[%s555 + $0x230] sm:$0xff]
        %v1423 = vld [vmem:[%s555 + $0x238] sm:$0xff]
        %v1424 = vld [vmem:[%s555 + $0x240] sm:$0xff]
        %v1425 = vld [vmem:[%s555 + $0x248] sm:$0xff]
        %v1426 = vld [vmem:[%s555 + $0x250] sm:$0xff]
        %v1427 = vld [vmem:[%s555 + $0x258] sm:$0xff]
        %v1428 = vld [vmem:[%s555 + $0x260] sm:$0xff]
        %v1429 = vld [vmem:[%s555 + $0x268] sm:$0xff]
        %v1430 = vld [vmem:[%s555 + $0x270] sm:$0xff]
        %v1431 = vld [vmem:[%s555 + $0x278] sm:$0xff]
        %1432 = vmatprep.subr.mxu0 0.0
        %1433 = vmatpush1.msra.mxu0 %v1416
        %1434 = vmatprep.subr.mxu0 0.0
        %1435 = vmatpush1.msra.mxu0 %v1417
        %1436 = vmatprep.subr.mxu0 0.0
        %1437 = vmatpush1.msra.mxu0 %v1418
        %1438 = vmatprep.subr.mxu0 0.0
        %1439 = vmatpush1.msra.mxu0 %v1419
        %1440 = vmatprep.subr.mxu0 0.0
        %1441 = vmatpush1.msra.mxu0 %v1420
        %1442 = vmatprep.subr.mxu0 0.0
        %1443 = vmatpush1.msra.mxu0 %v1421
        %1444 = vmatprep.subr.mxu0 0.0
        %1445 = vmatpush1.msra.mxu0 %v1422
        %1446 = vmatprep.subr.mxu0 0.0
        %1447 = vmatpush1.msra.mxu0 %v1423
        %1448 = vmatprep.subr.mxu0 0.0
        %1449 = vmatpush1.msra.mxu0 %v1424
        %1450 = vmatprep.subr.mxu0 0.0
        %1451 = vmatpush1.msra.mxu0 %v1425
        %1452 = vmatprep.subr.mxu0 0.0
        %1453 = vmatpush1.msra.mxu0 %v1426
        %1454 = vmatprep.subr.mxu0 0.0
        %1455 = vmatpush1.msra.mxu0 %v1427
        %1456 = vmatprep.subr.mxu0 0.0
        %1457 = vmatpush1.msra.mxu0 %v1428
        %1458 = vmatprep.subr.mxu0 0.0
        %1459 = vmatpush1.msra.mxu0 %v1429
        %1460 = vmatprep.subr.mxu0 0.0
        %1461 = vmatpush1.msra.mxu0 %v1430
        %1462 = vmatprep.subr.mxu0 0.0
        %1463 = vmatpush1.msra.mxu0 %v1431
        %1464 = vmatprep.subr.mxu0 0.0
        %1465 = vmatpush1.msra.mxu0 0.0
        %1466 = vmatprep.subr.mxu0 0.0
        %1467 = vmatpush1.msra.mxu0 0.0
        %1468 = vmatprep.subr.mxu0 0.0
        %1469 = vmatpush1.msra.mxu0 0.0
        %1470 = vmatprep.subr.mxu0 0.0
        %1471 = vmatpush1.msra.mxu0 0.0
        %1472 = vmatprep.subr.mxu0 0.0
        %1473 = vmatpush1.msra.mxu0 0.0
        %1474 = vmatprep.subr.mxu0 0.0
        %1475 = vmatpush1.msra.mxu0 0.0
        %1476 = vmatprep.subr.mxu0 0.0
        %1477 = vmatpush1.msra.mxu0 0.0
        %1478 = vmatprep.subr.mxu0 0.0
        %1479 = vmatpush1.msra.mxu0 0.0
        %1480 = vmatprep.subr.mxu0 0.0
        %1481 = vmatpush1.msra.mxu0 0.0
        %1482 = vmatprep.subr.mxu0 0.0
        %1483 = vmatpush1.msra.mxu0 0.0
        %1484 = vmatprep.subr.mxu0 0.0
        %1485 = vmatpush1.msra.mxu0 0.0
        %1486 = vmatprep.subr.mxu0 0.0
        %1487 = vmatpush1.msra.mxu0 0.0
        %1488 = vmatprep.subr.mxu0 0.0
        %1489 = vmatpush1.msra.mxu0 0.0
        %1490 = vmatprep.subr.mxu0 0.0
        %1491 = vmatpush1.msra.mxu0 0.0
        %1492 = vmatprep.subr.mxu0 0.0
        %1493 = vmatpush1.msra.mxu0 0.0
        %1494 = vmatprep.subr.mxu0 0.0
        %1495 = vmatpush1.msra.mxu0 0.0
        %1496 = vmatprep.mubr.f32.mxu0 0.0
        %1497 = vmatmul.mubr.f32.gmra.mrb[0].mxu0 %v1400
        %v1498 = vpop.f32.mrb[0].mxu0
        %v1499 = vadd.f32 0.0, %v1498
        %v1500 = vpop.f32.mrb[0].mxu0
        %1501 = vmatprep.mubr.f32.mxu0 0.0
        %1502 = vmatmul.mubr.f32.gmra.mrb[0].mxu0 %v1401
        %v1503 = vpop.f32.mrb[0].mxu0
        %v1504 = vadd.f32 0.0, %v1503
        %v1505 = vpop.f32.mrb[0].mxu0
        %1506 = vmatprep.mubr.f32.mxu0 0.0
        %1507 = vmatmul.mubr.f32.gmra.mrb[0].mxu0 %v1402
        %v1508 = vpop.f32.mrb[0].mxu0
        %v1509 = vadd.f32 0.0, %v1508
        %v1510 = vpop.f32.mrb[0].mxu0
        %1511 = vmatprep.mubr.f32.mxu0 0.0
        %1512 = vmatmul.mubr.f32.gmra.mrb[0].mxu0 %v1403
        %v1513 = vpop.f32.mrb[0].mxu0
        %v1514 = vadd.f32 0.0, %v1513
        %v1515 = vpop.f32.mrb[0].mxu0
        %1516 = vmatprep.mubr.f32.mxu0 0.0
        %1517 = vmatmul.mubr.f32.gmra.mrb[0].mxu0 %v1404
        %v1518 = vpop.f32.mrb[0].mxu0
        %v1519 = vadd.f32 0.0, %v1518
        %v1520 = vpop.f32.mrb[0].mxu0
        %1521 = vmatprep.mubr.f32.mxu0 0.0
        %1522 = vmatmul.mubr.f32.gmra.mrb[0].mxu0 %v1405
        %v1523 = vpop.f32.mrb[0].mxu0
        %v1524 = vadd.f32 0.0, %v1523
        %v1525 = vpop.f32.mrb[0].mxu0
        %1526 = vmatprep.mubr.f32.mxu0 0.0
        %1527 = vmatmul.mubr.f32.gmra.mrb[0].mxu0 %v1406
        %v1528 = vpop.f32.mrb[0].mxu0
        %v1529 = vadd.f32 0.0, %v1528
        %v1530 = vpop.f32.mrb[0].mxu0
        %1531 = vmatprep.mubr.f32.mxu0 0.0
        %1532 = vmatmul.mubr.f32.gmra.mrb[0].mxu0 %v1407
        %v1533 = vpop.f32.mrb[0].mxu0
        %v1534 = vadd.f32 0.0, %v1533
        %v1535 = vpop.f32.mrb[0].mxu0
        %1536 = vmatprep.mubr.f32.mxu0 0.0
        %1537 = vmatmul.mubr.f32.gmra.mrb[0].mxu0 %v1408
        %v1538 = vpop.f32.mrb[0].mxu0
        %v1539 = vadd.f32 0.0, %v1538
        %v1540 = vpop.f32.mrb[0].mxu0
        %1541 = vmatprep.mubr.f32.mxu0 0.0
        %1542 = vmatmul.mubr.f32.gmra.mrb[0].mxu0 %v1409
        %v1543 = vpop.f32.mrb[0].mxu0
        %v1544 = vadd.f32 0.0, %v1543
        %v1545 = vpop.f32.mrb[0].mxu0
        %1546 = vmatprep.mubr.f32.mxu0 0.0
        %1547 = vmatmul.mubr.f32.gmra.mrb[0].mxu0 %v1410
        %v1548 = vpop.f32.mrb[0].mxu0
        %v1549 = vadd.f32 0.0, %v1548
        %v1550 = vpop.f32.mrb[0].mxu0
        %1551 = vmatprep.mubr.f32.mxu0 0.0
        %1552 = vmatmul.mubr.f32.gmra.mrb[0].mxu0 %v1411
        %v1553 = vpop.f32.mrb[0].mxu0
        %v1554 = vadd.f32 0.0, %v1553
        %v1555 = vpop.f32.mrb[0].mxu0
        %1556 = vmatprep.mubr.f32.mxu0 0.0
        %1557 = vmatmul.mubr.f32.gmra.mrb[0].mxu0 %v1412
        %v1558 = vpop.f32.mrb[0].mxu0
        %v1559 = vadd.f32 0.0, %v1558
        %v1560 = vpop.f32.mrb[0].mxu0
        %1561 = vmatprep.mubr.f32.mxu0 0.0
        %1562 = vmatmul.mubr.f32.gmra.mrb[0].mxu0 %v1413
        %v1563 = vpop.f32.mrb[0].mxu0
        %v1564 = vadd.f32 0.0, %v1563
        %v1565 = vpop.f32.mrb[0].mxu0
        %1566 = vmatprep.mubr.f32.mxu0 0.0
        %1567 = vmatmul.mubr.f32.gmra.mrb[0].mxu0 %v1414
        %v1568 = vpop.f32.mrb[0].mxu0
        %v1569 = vadd.f32 0.0, %v1568
        %v1570 = vpop.f32.mrb[0].mxu0
        %1571 = vmatprep.mubr.f32.mxu0 0.0
        %1572 = vmatmul.mubr.f32.gmra.mrb[0].mxu0 %v1415
        %v1573 = vpop.f32.mrb[0].mxu0
        %v1574 = vadd.f32 0.0, %v1573
        %v1575 = vpop.f32.mrb[0].mxu0
        %1576 = vdwg.mxu0
        %v1577 = vadd.f32 %v1384, %v1499
        %v1578 = vadd.f32 %v1385, %v1504
        %v1579 = vadd.f32 %v1386, %v1509
        %v1580 = vadd.f32 %v1387, %v1514
        %v1581 = vadd.f32 %v1388, %v1519
        %v1582 = vadd.f32 %v1389, %v1524
        %v1583 = vadd.f32 %v1390, %v1529
        %v1584 = vadd.f32 %v1391, %v1534
        %v1585 = vadd.f32 %v1392, %v1539
        %v1586 = vadd.f32 %v1393, %v1544
        %v1587 = vadd.f32 %v1394, %v1549
        %v1588 = vadd.f32 %v1395, %v1554
        %v1589 = vadd.f32 %v1396, %v1559
        %v1590 = vadd.f32 %v1397, %v1564
        %v1591 = vadd.f32 %v1398, %v1569
        %v1592 = vadd.f32 %v1399, %v1574
        %1593 = vst [vmem:[#allocation2] sm:$0xff] %v1577
        %1594 = vst [vmem:[#allocation2 + $0x8] sm:$0xff] %v1578
        %1595 = vst [vmem:[#allocation2 + $0x10] sm:$0xff] %v1579
        %1596 = vst [vmem:[#allocation2 + $0x18] sm:$0xff] %v1580
        %1597 = vst [vmem:[#allocation2 + $0x20] sm:$0xff] %v1581
        %1598 = vst [vmem:[#allocation2 + $0x28] sm:$0xff] %v1582
        %1599 = vst [vmem:[#allocation2 + $0x30] sm:$0xff] %v1583
        %1600 = vst [vmem:[#allocation2 + $0x38] sm:$0xff] %v1584
        %1601 = vst [vmem:[#allocation2 + $0x40] sm:$0xff] %v1585
        %1602 = vst [vmem:[#allocation2 + $0x48] sm:$0xff] %v1586
        %1603 = vst [vmem:[#allocation2 + $0x50] sm:$0xff] %v1587
        %1604 = vst [vmem:[#allocation2 + $0x58] sm:$0xff] %v1588
        %1605 = vst [vmem:[#allocation2 + $0x60] sm:$0xff] %v1589
        %1606 = vst [vmem:[#allocation2 + $0x68] sm:$0xff] %v1590
        %1607 = vst [vmem:[#allocation2 + $0x70] sm:$0xff] %v1591
        %1608 = vst [vmem:[#allocation2 + $0x78] sm:$0xff] %v1592
        %p1609 = scmp.eq.s32.totalorder %s23, 4
        // Predicated region
        $region79: #{_layer4_forward_impl.1} parent=69 // pred_check
          %p1610 = pneg %p1609
        $region80: #{_layer4_forward_impl.1} parent=69 // pred_check_branch
          %1612 = sbr.rel (%p1610) target = $region82
        $region81: #{_layer4_forward_impl.1} parent=69 // pred_region
          %v1613 = vld [vmem:[#allocation2] sm:$0xff]
          %v1614 = vld [vmem:[#allocation2 + $0x8] sm:$0xff]
          %v1615 = vld [vmem:[#allocation2 + $0x10] sm:$0xff]
          %v1616 = vld [vmem:[#allocation2 + $0x18] sm:$0xff]
          %v1617 = vld [vmem:[#allocation2 + $0x20] sm:$0xff]
          %v1618 = vld [vmem:[#allocation2 + $0x28] sm:$0xff]
          %v1619 = vld [vmem:[#allocation2 + $0x30] sm:$0xff]
          %v1620 = vld [vmem:[#allocation2 + $0x38] sm:$0xff]
          %v1621 = vld [vmem:[#allocation2 + $0x40] sm:$0xff]
          %v1622 = vld [vmem:[#allocation2 + $0x48] sm:$0xff]
          %v1623 = vld [vmem:[#allocation2 + $0x50] sm:$0xff]
          %v1624 = vld [vmem:[#allocation2 + $0x58] sm:$0xff]
          %v1625 = vld [vmem:[#allocation2 + $0x60] sm:$0xff]
          %v1626 = vld [vmem:[#allocation2 + $0x68] sm:$0xff]
          %v1627 = vld [vmem:[#allocation2 + $0x70] sm:$0xff]
          %v1628 = vld [vmem:[#allocation2 + $0x78] sm:$0xff]
          %v1629 = vmax.f32 %v1613, 0.0
          %v1630 = vmax.f32 %v1614, 0.0
          %v1631 = vmax.f32 %v1615, 0.0
          %v1632 = vmax.f32 %v1616, 0.0
          %v1633 = vmax.f32 %v1617, 0.0
          %v1634 = vmax.f32 %v1618, 0.0
          %v1635 = vmax.f32 %v1619, 0.0
          %v1636 = vmax.f32 %v1620, 0.0
          %v1637 = vmax.f32 %v1621, 0.0
          %v1638 = vmax.f32 %v1622, 0.0
          %v1639 = vmax.f32 %v1623, 0.0
          %v1640 = vmax.f32 %v1624, 0.0
          %v1641 = vmax.f32 %v1625, 0.0
          %v1642 = vmax.f32 %v1626, 0.0
          %v1643 = vmax.f32 %v1627, 0.0
          %v1644 = vmax.f32 %v1628, 0.0
          %1645 = vst [vmem:[#allocation2] sm:$0xff] %v1629
          %1646 = vst [vmem:[#allocation2 + $0x8] sm:$0xff] %v1630
          %1647 = vst [vmem:[#allocation2 + $0x10] sm:$0xff] %v1631
          %1648 = vst [vmem:[#allocation2 + $0x18] sm:$0xff] %v1632
          %1649 = vst [vmem:[#allocation2 + $0x20] sm:$0xff] %v1633
          %1650 = vst [vmem:[#allocation2 + $0x28] sm:$0xff] %v1634
          %1651 = vst [vmem:[#allocation2 + $0x30] sm:$0xff] %v1635
          %1652 = vst [vmem:[#allocation2 + $0x38] sm:$0xff] %v1636
          %1653 = vst [vmem:[#allocation2 + $0x40] sm:$0xff] %v1637
          %1654 = vst [vmem:[#allocation2 + $0x48] sm:$0xff] %v1638
          %1655 = vst [vmem:[#allocation2 + $0x50] sm:$0xff] %v1639
          %1656 = vst [vmem:[#allocation2 + $0x58] sm:$0xff] %v1640
          %1657 = vst [vmem:[#allocation2 + $0x60] sm:$0xff] %v1641
          %1658 = vst [vmem:[#allocation2 + $0x68] sm:$0xff] %v1642
          %1659 = vst [vmem:[#allocation2 + $0x70] sm:$0xff] %v1643
          %1660 = vst [vmem:[#allocation2 + $0x78] sm:$0xff] %v1644
          %v1661 = vld [vmem:[#allocation2] sm:$0xff]
          %v1662 = vld [vmem:[#allocation2 + $0x8] sm:$0xff]
          %v1663 = vld [vmem:[#allocation2 + $0x10] sm:$0xff]
          %v1664 = vld [vmem:[#allocation2 + $0x18] sm:$0xff]
          %v1665 = vld [vmem:[#allocation2 + $0x20] sm:$0xff]
          %v1666 = vld [vmem:[#allocation2 + $0x28] sm:$0xff]
          %v1667 = vld [vmem:[#allocation2 + $0x30] sm:$0xff]
          %v1668 = vld [vmem:[#allocation2 + $0x38] sm:$0xff]
          %v1669 = vld [vmem:[#allocation2 + $0x40] sm:$0xff]
          %v1670 = vld [vmem:[#allocation2 + $0x48] sm:$0xff]
          %v1671 = vld [vmem:[#allocation2 + $0x50] sm:$0xff]
          %v1672 = vld [vmem:[#allocation2 + $0x58] sm:$0xff]
          %v1673 = vld [vmem:[#allocation2 + $0x60] sm:$0xff]
          %v1674 = vld [vmem:[#allocation2 + $0x68] sm:$0xff]
          %v1675 = vld [vmem:[#allocation2 + $0x70] sm:$0xff]
          %v1676 = vld [vmem:[#allocation2 + $0x78] sm:$0xff]
          %v1677 = vadd.f32 %v1661, %v1662
          %v1678 = vadd.f32 %v1677, %v1663
          %v1679 = vadd.f32 %v1678, %v1664
          %v1680 = vadd.f32 %v1679, %v1665
          %v1681 = vadd.f32 %v1680, %v1666
          %v1682 = vadd.f32 %v1681, %v1667
          %v1683 = vadd.f32 %v1682, %v1668
          %v1684 = vadd.f32 %v1683, %v1669
          %v1685 = vadd.f32 %v1684, %v1670
          %v1686 = vadd.f32 %v1685, %v1671
          %v1687 = vadd.f32 %v1686, %v1672
          %v1688 = vadd.f32 %v1687, %v1673
          %v1689 = vadd.f32 %v1688, %v1674
          %v1690 = vadd.f32 %v1689, %v1675
          %v1691 = vadd.f32 %v1690, %v1676
          %v1692 = vrot.slane %v1691, 4
          %v1693 = vadd.f32 %v1691, %v1692
          %v1694 = vrot.slane %v1693, 2
          %v1695 = vadd.f32 %v1693, %v1694
          %v1696 = vrot.slane %v1695, 1
          %v1697 = vadd.f32 %v1695, %v1696
          %v1698 = vmul.f32 %v1697, 0.0078125
          %v1699 = vsub.f32 %v1661, %v1698
          %v1700 = vsub.f32 %v1662, %v1698
          %v1701 = vsub.f32 %v1663, %v1698
          %v1702 = vsub.f32 %v1664, %v1698
          %v1703 = vsub.f32 %v1665, %v1698
          %v1704 = vsub.f32 %v1666, %v1698
          %v1705 = vsub.f32 %v1667, %v1698
          %v1706 = vsub.f32 %v1668, %v1698
          %v1707 = vsub.f32 %v1669, %v1698
          %v1708 = vsub.f32 %v1670, %v1698
          %v1709 = vsub.f32 %v1671, %v1698
          %v1710 = vsub.f32 %v1672, %v1698
          %v1711 = vsub.f32 %v1673, %v1698
          %v1712 = vsub.f32 %v1674, %v1698
          %v1713 = vsub.f32 %v1675, %v1698
          %v1714 = vsub.f32 %v1676, %v1698
          %v1715 = vmul.f32 %v1699, %v1699
          %v1716 = vmul.f32 %v1700, %v1700
          %v1717 = vmul.f32 %v1701, %v1701
          %v1718 = vmul.f32 %v1702, %v1702
          %v1719 = vmul.f32 %v1703, %v1703
          %v1720 = vmul.f32 %v1704, %v1704
          %v1721 = vmul.f32 %v1705, %v1705
          %v1722 = vmul.f32 %v1706, %v1706
          %v1723 = vmul.f32 %v1707, %v1707
          %v1724 = vmul.f32 %v1708, %v1708
          %v1725 = vmul.f32 %v1709, %v1709
          %v1726 = vmul.f32 %v1710, %v1710
          %v1727 = vmul.f32 %v1711, %v1711
          %v1728 = vmul.f32 %v1712, %v1712
          %v1729 = vmul.f32 %v1713, %v1713
          %v1730 = vmul.f32 %v1714, %v1714
          %v1731 = vadd.f32 %v1715, %v1716
          %v1732 = vadd.f32 %v1731, %v1717
          %v1733 = vadd.f32 %v1732, %v1718
          %v1734 = vadd.f32 %v1733, %v1719
          %v1735 = vadd.f32 %v1734, %v1720
          %v1736 = vadd.f32 %v1735, %v1721
          %v1737 = vadd.f32 %v1736, %v1722
          %v1738 = vadd.f32 %v1737, %v1723
          %v1739 = vadd.f32 %v1738, %v1724
          %v1740 = vadd.f32 %v1739, %v1725
          %v1741 = vadd.f32 %v1740, %v1726
          %v1742 = vadd.f32 %v1741, %v1727
          %v1743 = vadd.f32 %v1742, %v1728
          %v1744 = vadd.f32 %v1743, %v1729
          %v1745 = vadd.f32 %v1744, %v1730
          %v1746 = vrot.slane %v1745, 4
          %v1747 = vadd.f32 %v1745, %v1746
          %v1748 = vrot.slane %v1747, 2
          %v1749 = vadd.f32 %v1747, %v1748
          %v1750 = vrot.slane %v1749, 1
          %v1751 = vadd.f32 %v1749, %v1750
          %v1752 = vmul.f32 %v1751, 0.0078125
          %v1753 = vld [vmem:[%s586] sm:$0x1]
          %v1754 = vadd.f32 %v1752, 1e-05
          %v1755 = vrsqrt.pop %v1754
          %v1756 = vmul.f32 %v1753, %v1755
          %v1758 = vlaneseq
          %v1759 = vshrl.u32 %v1758, 7
          %v1760 = vsub.s32 0, %v1759
          %v1761 = vrot.slane %v1756, %v1760
          %v1763 = vmul.f32 %v1699, %v1761
          %v1764 = vmul.f32 %v1700, %v1761
          %v1765 = vmul.f32 %v1701, %v1761
          %v1766 = vmul.f32 %v1702, %v1761
          %v1767 = vmul.f32 %v1703, %v1761
          %v1768 = vmul.f32 %v1704, %v1761
          %v1769 = vmul.f32 %v1705, %v1761
          %v1770 = vmul.f32 %v1706, %v1761
          %v1771 = vmul.f32 %v1707, %v1761
          %v1772 = vmul.f32 %v1708, %v1761
          %v1773 = vmul.f32 %v1709, %v1761
          %v1774 = vmul.f32 %v1710, %v1761
          %v1775 = vmul.f32 %v1711, %v1761
          %v1776 = vmul.f32 %v1712, %v1761
          %v1777 = vmul.f32 %v1713, %v1761
          %v1778 = vmul.f32 %v1714, %v1761
          %v1779 = vld [vmem:[%s589] sm:$0x1]
          %v1781 = vlaneseq
          %v1782 = vshrl.u32 %v1781, 7
          %v1783 = vsub.s32 0, %v1782
          %v1784 = vrot.slane %v1779, %v1783
          %v1786 = vadd.f32 %v1763, %v1784
          %v1787 = vadd.f32 %v1764, %v1784
          %v1788 = vadd.f32 %v1765, %v1784
          %v1789 = vadd.f32 %v1766, %v1784
          %v1790 = vadd.f32 %v1767, %v1784
          %v1791 = vadd.f32 %v1768, %v1784
          %v1792 = vadd.f32 %v1769, %v1784
          %v1793 = vadd.f32 %v1770, %v1784
          %v1794 = vadd.f32 %v1771, %v1784
          %v1795 = vadd.f32 %v1772, %v1784
          %v1796 = vadd.f32 %v1773, %v1784
          %v1797 = vadd.f32 %v1774, %v1784
          %v1798 = vadd.f32 %v1775, %v1784
          %v1799 = vadd.f32 %v1776, %v1784
          %v1800 = vadd.f32 %v1777, %v1784
          %v1801 = vadd.f32 %v1778, %v1784
          %1802 = vst [vmem:[%s583] sm:$0xff] %v1786
          %1803 = vst [vmem:[%s583 + $0x8] sm:$0xff] %v1787
          %1804 = vst [vmem:[%s583 + $0x10] sm:$0xff] %v1788
          %1805 = vst [vmem:[%s583 + $0x18] sm:$0xff] %v1789
          %1806 = vst [vmem:[%s583 + $0x20] sm:$0xff] %v1790
          %1807 = vst [vmem:[%s583 + $0x28] sm:$0xff] %v1791
          %1808 = vst [vmem:[%s583 + $0x30] sm:$0xff] %v1792
          %1809 = vst [vmem:[%s583 + $0x38] sm:$0xff] %v1793
          %1810 = vst [vmem:[%s583 + $0x40] sm:$0xff] %v1794
          %1811 = vst [vmem:[%s583 + $0x48] sm:$0xff] %v1795
          %1812 = vst [vmem:[%s583 + $0x50] sm:$0xff] %v1796
          %1813 = vst [vmem:[%s583 + $0x58] sm:$0xff] %v1797
          %1814 = vst [vmem:[%s583 + $0x60] sm:$0xff] %v1798
          %1815 = vst [vmem:[%s583 + $0x68] sm:$0xff] %v1799
          %1816 = vst [vmem:[%s583 + $0x70] sm:$0xff] %v1800
          %1817 = vst [vmem:[%s583 + $0x78] sm:$0xff] %v1801
        $region82: #{_layer4_forward_impl.1} parent=69 // pred_fallthru
          _
        %s1818 = sand.u32 %s139, 1
        %s1819 = scalar_lea.sflag [#allocation5], %s1818
        %s1820 = sand.u32 %s139, 1
        %s1821 = smul.addr %s1820, 128
        %s1822 = scalar_lea.vmem [#allocation4], %s1821
        // Predicated region
        $region83: #{_layer4_forward_impl.1} parent=69 // pred_check
          %p1823 = pneg %p149
        $region84: #{_layer4_forward_impl.1} parent=69 // pred_check_branch
          %1825 = sbr.rel (%p1823) target = $region86
        $region85: #{_layer4_forward_impl.1} parent=69 // pred_region
          %s1827 = ssub.s32 2048, 2048
          %1828 = vsyncadd %s1819, %s1827
          %s1829 = smul.addr %s22, 128
          %s1830 = scalar_lea.hbm %s4, %s1829
          %s1831 = sshll.u32 %s1822, 4
          %s1832 = int_to_ptr.vmem [resolvable:$true] %s1831
          %1837 = dma.vmem_to_hbm [thread:$0]  %s1832, 2048, %s1830, %s1819, 128, 256, 8
        $region86: #{_layer4_forward_impl.1} parent=69 // pred_fallthru
          _
      $region70: #{_layer4_forward_impl.1} parent=5 // pred_fallthru
        _
      %p1838 = scmp.le.s32.totalorder 2, %s13
      // Predicated region
      $region87: #{_layer4_forward_impl.1} parent=5 // pred_check
        %p1839 = pneg %p1838
      $region88: #{_layer4_forward_impl.1} parent=5 // pred_check_branch
        %1841 = sbr.rel (%p1839) target = $region90
      $region89: #{_layer4_forward_impl.1} parent=5 // pred_region
        %s1842 = ssub.s32 %s13, 2
        // Predicated region
        $region91: #{_layer4_forward_impl.1} parent=89 // pred_check
          %p1843 = pneg %p155
        $region92: #{_layer4_forward_impl.1} parent=89 // pred_check_branch
          %1845 = sbr.rel (%p1843) target = $region94
        $region93: #{_layer4_forward_impl.1} parent=89 // pred_region
          %s1846 = sand.u32 %s140, 1
          %s1847 = scalar_lea.sflag [#allocation5], %s1846
          %s1848 = sand.u32 %s140, 1
          %s1849 = smul.addr %s1848, 128
          %s1850 = scalar_lea.vmem [#allocation4], %s1849
          %1851 = dma.done %s1847, 2048
        $region94: #{_layer4_forward_impl.1} parent=89 // pred_fallthru
          _
      $region90: #{_layer4_forward_impl.1} parent=5 // pred_fallthru
        _
    $region6: #{_layer4_forward_impl.1} parent=1 // loop_footer
      %s17 = sadd.s32 1, %s13
    $region7: #{_layer4_forward_impl.1} parent=1 // loop_footer_branch
      %12 = sbr.rel target = $region3
    $region8: #{_layer4_forward_impl.1} parent=1 // loop_exit
      _
    %1852 = vsyncpa [#allocation5], 1
    %s1853 = scalar_lea.sflag [#allocation5], 1
    %1854 = vsyncpa %s1853, 1

</llo_original>
